<compile_context>
chip_gen: v7x
topology: tpu7x:2x2x1
jax: 0.10.0
libtpu: 0.0.40
codegen_flags: <defaults>
</compile_context>

<pallas_src>
import jax
import jax.numpy as jnp
from jax.experimental import pallas as pl
from jax.experimental.pallas import tpu as pltpu


def _reseca_kernel(x_ref, tconv_ref, wmax_ref, wmean_ref, bsp_ref, o_ref,
                   pmax_ref, pmean_ref):
    _, C, H, W = x_ref.shape
    x = x_ref[0]                                              # (C, H, W) f32

    # ---- ECA channel gate ------------------------------------------------
    # global avg / max pool over the spatial dims (keepdims -> cheap layouts)
    s_avg = jnp.sum(jnp.sum(x, axis=2, keepdims=True), axis=1,
                    keepdims=True) / float(H * W)             # (C, 1, 1)
    s_max = jnp.max(jnp.max(x, axis=2, keepdims=True), axis=1,
                    keepdims=True)                            # (C, 1, 1)
    pooled = (s_avg + s_max).reshape(C, 1)                    # (C, 1)
    # conv1d(k=3, pad=1, bias-free) over channels is linear, so
    # conv(avg) + conv(max) == conv(avg + max); the banded conv is folded into
    # a (C, C) Toeplitz matrix in the wrapper.
    g = jnp.dot(tconv_ref[...], pooled,
                preferred_element_type=jnp.float32)           # (C, 1)
    gate = 1.0 / (1.0 + jnp.exp(-g))                          # sigmoid, (C, 1)
    x0 = x * gate.reshape(C, 1, 1)                            # (C, H, W)

    # ---- spatial attention: channel max / mean maps -----------------------
    cmax = jnp.max(x0, axis=0)                                # (H, W)
    cmean = jnp.sum(x0, axis=0) / float(C)                    # (H, W)

    # 7x7 conv (2 -> 1 channels, pad 3) via zero-padded VMEM scratch.
    # Scratch is tiny; zero it every grid step (cannot guard with
    # program_id == 0: under megacore "parallel" batch sharding a core may
    # never see step 0).
    pmax_ref[...] = jnp.zeros(pmax_ref.shape, pmax_ref.dtype)
    pmean_ref[...] = jnp.zeros(pmean_ref.shape, pmean_ref.dtype)
    pmax_ref[3:H + 3, 3:W + 3] = cmax
    pmean_ref[3:H + 3, 3:W + 3] = cmean

    wmax = wmax_ref[...]                                      # (7, 7) load once
    wmean = wmean_ref[...]                                    # (7, 7) load once
    acc = jnp.zeros((H, W), jnp.float32) + bsp_ref[...]       # bias splat
    for ky in range(7):
        for kx in range(7):
            acc = acc + (pmax_ref[ky:ky + H, kx:kx + W]
                         * wmax[ky:ky + 1, kx:kx + 1]
                         + pmean_ref[ky:ky + H, kx:kx + W]
                         * wmean[ky:ky + 1, kx:kx + 1])
    z = 1.0 / (1.0 + jnp.exp(-acc))                           # sigmoid, (H, W)

    # ---- combine -----------------------------------------------------------
    out = x0 * z[None, :, :] + x
    o_ref[0] = out.astype(o_ref.dtype)


def _toeplitz_from_conv1d(w3, C):
    """Fold Conv1d(1, 1, k=3, padding=1, bias=False) over channels into (C, C)."""
    w3 = w3.reshape(-1).astype(jnp.float32)                   # (3,)
    i = jnp.arange(C)[:, None]
    j = jnp.arange(C)[None, :]
    d = j - i
    taps = w3[jnp.clip(d + 1, 0, 2)]
    return jnp.where(jnp.abs(d) <= 1, taps, 0.0).astype(jnp.float32)


def reseca_pallas(x, conv1d_w, spatial_w, spatial_b):
    """x: (B, C, H, W) NCHW.  conv1d_w: (3,).  spatial_w: (2,7,7).  spatial_b: (1,)."""
    B, C, H, W = x.shape
    x = x.astype(jnp.float32)
    tconv = _toeplitz_from_conv1d(conv1d_w, C)                # (C, C)
    wmax = spatial_w[0].astype(jnp.float32)                   # taps for channel-max map
    wmean = spatial_w[1].astype(jnp.float32)                  # taps for channel-mean map
    bsp = spatial_b.astype(jnp.float32).reshape(1, 1)

    in_specs = [
        pl.BlockSpec((1, C, H, W), lambda b: (b, 0, 0, 0)),
        pl.BlockSpec((C, C), lambda b: (0, 0)),
        pl.BlockSpec((7, 7), lambda b: (0, 0)),
        pl.BlockSpec((7, 7), lambda b: (0, 0)),
        pl.BlockSpec((1, 1), lambda b: (0, 0)),
    ]
    out_spec = pl.BlockSpec((1, C, H, W), lambda b: (b, 0, 0, 0))

    return pl.pallas_call(
        _reseca_kernel,
        out_shape=jax.ShapeDtypeStruct((B, C, H, W), jnp.float32),
        grid_spec=pltpu.PrefetchScalarGridSpec(
            num_scalar_prefetch=0,
            grid=(B,),
            in_specs=in_specs,
            out_specs=out_spec,
            scratch_shapes=[pltpu.VMEM((H + 6, W + 6), jnp.float32),
                            pltpu.VMEM((H + 6, W + 6), jnp.float32)],
        ),
        compiler_params=pltpu.CompilerParams(
            dimension_semantics=("parallel",)),
    )(x, tconv, wmax, wmean, bsp)


def make_params(key, k_size=3):
    """Deterministic synthetic parameters (shapes match the PyTorch module)."""
    k1, k2, k3 = jax.random.split(key, 3)
    conv1d_w = jax.random.normal(k1, (k_size,), jnp.float32) * 0.5   # Conv1d(1,1,3,bias=False)
    spatial_w = jax.random.normal(k2, (2, 7, 7), jnp.float32) * 0.1  # Conv2d(2,1,7).weight[0]
    spatial_b = jax.random.normal(k3, (1,), jnp.float32) * 0.1       # Conv2d(2,1,7).bias
    return conv1d_w, spatial_w, spatial_b


def reference(x, conv1d_w, spatial_w, spatial_b):
    """Pure-JAX mirror of the PyTorch forward (k_size=3)."""
    B, C, H, W = x.shape
    x = x.astype(jnp.float32)
    avg = jnp.mean(x, axis=(2, 3))                            # (B, C)
    mx = jnp.max(x, axis=(2, 3))                              # (B, C)

    def conv1d_channels(v):                                   # (B, C) -> (B, C)
        vp = jnp.pad(v, ((0, 0), (1, 1)))
        return (conv1d_w[0] * vp[:, 0:C]
                + conv1d_w[1] * vp[:, 1:C + 1]
                + conv1d_w[2] * vp[:, 2:C + 2])

    y = jax.nn.sigmoid(conv1d_channels(avg) + conv1d_channels(mx))
    x0 = x * y[:, :, None, None]
    cmax = jnp.max(x0, axis=1)                                # (B, H, W)
    cmean = jnp.mean(x0, axis=1)                              # (B, H, W)
    zin = jnp.stack([cmax, cmean], axis=1)                    # (B, 2, H, W)
    zp = jnp.pad(zin, ((0, 0), (0, 0), (3, 3), (3, 3)))
    acc = jnp.zeros((B, H, W), jnp.float32) + spatial_b[0]
    for cin in range(2):
        for ky in range(7):
            for kx in range(7):
                acc = acc + spatial_w[cin, ky, kx] * zp[:, cin, ky:ky + H, kx:kx + W]
    z = jax.nn.sigmoid(acc)
    return x0 * z[:, None, :, :] + x


if __name__ == "__main__":
    key = jax.random.PRNGKey(0)
    kx, kp = jax.random.split(key)

    B, C, H, W = 2, 4, 16, 16
    x = jax.random.normal(kx, (B, C, H, W), jnp.float32)
    conv1d_w, spatial_w, spatial_b = make_params(kp)

    out = reseca_pallas(x, conv1d_w, spatial_w, spatial_b)
    out = jax.block_until_ready(out)

    ref = reference(x, conv1d_w, spatial_w, spatial_b)
    assert out.shape == ref.shape == (B, C, H, W)
    assert jnp.allclose(out, ref, atol=1e-4, rtol=1e-4), "mismatch vs reference"
    print("KERNEL_OK")
</pallas_src>

<mosaic_0001>
module attributes {stable_mosaic.version = 11 : i64} {
  func.func @_reseca_kernel(%arg0: i32, %arg1: memref<1x4x16x16xf32, #tpu.memory_space<vmem>>, %arg2: memref<4x4xf32, #tpu.memory_space<vmem>>, %arg3: memref<7x7xf32, #tpu.memory_space<vmem>>, %arg4: memref<7x7xf32, #tpu.memory_space<vmem>>, %arg5: memref<1x1xf32, #tpu.memory_space<vmem>>, %arg6: memref<1x4x16x16xf32, #tpu.memory_space<vmem>>, %arg7: memref<22x22xf32, #tpu.memory_space<vmem>>, %arg8: memref<22x22xf32, #tpu.memory_space<vmem>>) attributes {dimension_semantics = [#tpu.dimension_semantics<parallel>], iteration_bounds = array<i64: 2>, scalar_prefetch = 0 : i64, scratch_operands = 2 : i64, tpu.core_type = #tpu.core_type<tc>, window_params = [{transform_indices = @transform_0, window_bounds = array<i64: 1, 4, 16, 16>}, {pipeline_mode = #tpu.pipeline_mode<synchronous>, transform_indices = @transform_1, window_bounds = array<i64: 4, 4>}, {pipeline_mode = #tpu.pipeline_mode<synchronous>, transform_indices = @transform_2, window_bounds = array<i64: 7, 7>}, {pipeline_mode = #tpu.pipeline_mode<synchronous>, transform_indices = @transform_3, window_bounds = array<i64: 7, 7>}, {pipeline_mode = #tpu.pipeline_mode<synchronous>, transform_indices = @transform_4, window_bounds = array<i64: 1, 1>}, {transform_indices = @transform_5, window_bounds = array<i64: 1, 4, 16, 16>}]} {
    %c0 = arith.constant 0 : index
    %c0_0 = arith.constant 0 : index
    %c0_1 = arith.constant 0 : index
    %c0_2 = arith.constant 0 : index
    %0 = vector.load %arg1[%c0, %c0_0, %c0_1, %c0_2] : memref<1x4x16x16xf32, #tpu.memory_space<vmem>>, vector<1x4x16x16xf32>
    %1 = vector.shape_cast %0 : vector<1x4x16x16xf32> to vector<4x16x16xf32>
    %cst = arith.constant dense<0.000000e+00> : vector<4x16xf32>
    %2 = vector.multi_reduction <add>, %1, %cst [2] : vector<4x16x16xf32> to vector<4x16xf32>
    %3 = vector.shape_cast %2 : vector<4x16xf32> to vector<4x16x1xf32>
    %cst_3 = arith.constant dense<0.000000e+00> : vector<4x1xf32>
    %4 = vector.multi_reduction <add>, %3, %cst_3 [1] : vector<4x16x1xf32> to vector<4x1xf32>
    %5 = vector.shape_cast %4 : vector<4x1xf32> to vector<4x1x1xf32>
    %cst_4 = arith.constant 2.560000e+02 : f32
    %6 = vector.broadcast %cst_4 : f32 to vector<4x1x1xf32>
    %7 = arith.divf %5, %6 : vector<4x1x1xf32>
    %cst_5 = arith.constant dense<0xFF800000> : vector<4x16xf32>
    %8 = vector.multi_reduction <maximumf>, %1, %cst_5 [2] : vector<4x16x16xf32> to vector<4x16xf32>
    %9 = vector.shape_cast %8 : vector<4x16xf32> to vector<4x16x1xf32>
    %cst_6 = arith.constant dense<0xFF800000> : vector<4x1xf32>
    %10 = vector.multi_reduction <maximumf>, %9, %cst_6 [1] : vector<4x16x1xf32> to vector<4x1xf32>
    %11 = vector.shape_cast %10 : vector<4x1xf32> to vector<4x1x1xf32>
    %12 = arith.addf %7, %11 : vector<4x1x1xf32>
    %13 = vector.shape_cast %12 : vector<4x1x1xf32> to vector<4x1xf32>
    %c0_7 = arith.constant 0 : index
    %c0_8 = arith.constant 0 : index
    %14 = vector.load %arg2[%c0_7, %c0_8] : memref<4x4xf32, #tpu.memory_space<vmem>>, vector<4x4xf32>
    %cst_9 = arith.constant dense<0.000000e+00> : vector<4x1xf32>
    %15 = tpu.matmul %14, %13, %cst_9 {dimension_numbers = #tpu.dot_dimension_numbers<[1], [0], [0], [1], [0, 0, 1, 1], [], []>} : vector<4x4xf32>, vector<4x1xf32>, vector<4x1xf32> -> vector<4x1xf32>
    %cst_10 = arith.constant 0.000000e+00 : f32
    %16 = vector.broadcast %cst_10 : f32 to vector<4x1xf32>
    %17 = arith.subf %16, %15 : vector<4x1xf32>
    %18 = math.exp %17 : vector<4x1xf32>
    %cst_11 = arith.constant 1.000000e+00 : f32
    %19 = vector.broadcast %cst_11 : f32 to vector<4x1xf32>
    %20 = arith.addf %19, %18 : vector<4x1xf32>
    %cst_12 = arith.constant 1.000000e+00 : f32
    %21 = vector.broadcast %cst_12 : f32 to vector<4x1xf32>
    %22 = arith.divf %21, %20 : vector<4x1xf32>
    %23 = vector.shape_cast %22 : vector<4x1xf32> to vector<4x1x1xf32>
    %24 = vector.broadcast %23 : vector<4x1x1xf32> to vector<4x16x16xf32>
    %25 = arith.mulf %1, %24 : vector<4x16x16xf32>
    %cst_13 = arith.constant dense<0xFF800000> : vector<16x16xf32>
    %26 = vector.multi_reduction <maximumf>, %25, %cst_13 [0] : vector<4x16x16xf32> to vector<16x16xf32>
    %cst_14 = arith.constant dense<0.000000e+00> : vector<16x16xf32>
    %27 = vector.multi_reduction <add>, %25, %cst_14 [0] : vector<4x16x16xf32> to vector<16x16xf32>
    %cst_15 = arith.constant 4.000000e+00 : f32
    %28 = vector.broadcast %cst_15 : f32 to vector<16x16xf32>
    %29 = arith.divf %27, %28 : vector<16x16xf32>
    %cst_16 = arith.constant 0.000000e+00 : f32
    %30 = vector.broadcast %cst_16 : f32 to vector<22x22xf32>
    %c0_17 = arith.constant 0 : index
    %c0_18 = arith.constant 0 : index
    %31 = vector.load %arg7[%c0_17, %c0_18] : memref<22x22xf32, #tpu.memory_space<vmem>>, vector<22x22xf32>
    tpu.vector_store %arg7[%c0_17, %c0_18], %30 {strides = array<i32>} : memref<22x22xf32, #tpu.memory_space<vmem>>, vector<22x22xf32>,
    %cst_19 = arith.constant 0.000000e+00 : f32
    %32 = vector.broadcast %cst_19 : f32 to vector<22x22xf32>
    %c0_20 = arith.constant 0 : index
    %c0_21 = arith.constant 0 : index
    %33 = vector.load %arg8[%c0_20, %c0_21] : memref<22x22xf32, #tpu.memory_space<vmem>>, vector<22x22xf32>
    tpu.vector_store %arg8[%c0_20, %c0_21], %32 {strides = array<i32>} : memref<22x22xf32, #tpu.memory_space<vmem>>, vector<22x22xf32>,
    %c3 = arith.constant 3 : index
    %c3_22 = arith.constant 3 : index
    %34 = vector.load %arg7[%c3, %c3_22] : memref<22x22xf32, #tpu.memory_space<vmem>>, vector<16x16xf32>
    tpu.vector_store %arg7[%c3, %c3_22], %26 {strides = array<i32>} : memref<22x22xf32, #tpu.memory_space<vmem>>, vector<16x16xf32>,
    %c3_23 = arith.constant 3 : index
    %c3_24 = arith.constant 3 : index
    %35 = vector.load %arg8[%c3_23, %c3_24] : memref<22x22xf32, #tpu.memory_space<vmem>>, vector<16x16xf32>
    tpu.vector_store %arg8[%c3_23, %c3_24], %29 {strides = array<i32>} : memref<22x22xf32, #tpu.memory_space<vmem>>, vector<16x16xf32>,
    %c0_25 = arith.constant 0 : index
    %c0_26 = arith.constant 0 : index
    %36 = vector.load %arg3[%c0_25, %c0_26] : memref<7x7xf32, #tpu.memory_space<vmem>>, vector<7x7xf32>
    %c0_27 = arith.constant 0 : index
    %c0_28 = arith.constant 0 : index
    %37 = vector.load %arg4[%c0_27, %c0_28] : memref<7x7xf32, #tpu.memory_space<vmem>>, vector<7x7xf32>
    %cst_29 = arith.constant 0.000000e+00 : f32
    %38 = vector.broadcast %cst_29 : f32 to vector<16x16xf32>
    %c0_30 = arith.constant 0 : index
    %c0_31 = arith.constant 0 : index
    %39 = vector.load %arg5[%c0_30, %c0_31] : memref<1x1xf32, #tpu.memory_space<vmem>>, vector<1x1xf32>
    %40 = vector.broadcast %39 : vector<1x1xf32> to vector<16x16xf32>
    %41 = arith.addf %38, %40 : vector<16x16xf32>
    %c0_32 = arith.constant 0 : index
    %c0_33 = arith.constant 0 : index
    %42 = vector.load %arg7[%c0_32, %c0_33] : memref<22x22xf32, #tpu.memory_space<vmem>>, vector<16x16xf32>
    %43 = vector.extract_strided_slice %36 {offsets = [0, 0], sizes = [1, 1], strides = [1, 1]} : vector<7x7xf32> to vector<1x1xf32>
    %44 = vector.broadcast %43 : vector<1x1xf32> to vector<16x16xf32>
    %45 = arith.mulf %42, %44 : vector<16x16xf32>
    %c0_34 = arith.constant 0 : index
    %c0_35 = arith.constant 0 : index
    %46 = vector.load %arg8[%c0_34, %c0_35] : memref<22x22xf32, #tpu.memory_space<vmem>>, vector<16x16xf32>
    %47 = vector.extract_strided_slice %37 {offsets = [0, 0], sizes = [1, 1], strides = [1, 1]} : vector<7x7xf32> to vector<1x1xf32>
    %48 = vector.broadcast %47 : vector<1x1xf32> to vector<16x16xf32>
    %49 = arith.mulf %46, %48 : vector<16x16xf32>
    %50 = arith.addf %45, %49 : vector<16x16xf32>
    %51 = arith.addf %41, %50 : vector<16x16xf32>
    %c0_36 = arith.constant 0 : index
    %c1 = arith.constant 1 : index
    %52 = vector.load %arg7[%c0_36, %c1] : memref<22x22xf32, #tpu.memory_space<vmem>>, vector<16x16xf32>
    %53 = vector.extract_strided_slice %36 {offsets = [0, 1], sizes = [1, 1], strides = [1, 1]} : vector<7x7xf32> to vector<1x1xf32>
    %54 = vector.broadcast %53 : vector<1x1xf32> to vector<16x16xf32>
    %55 = arith.mulf %52, %54 : vector<16x16xf32>
    %c0_37 = arith.constant 0 : index
    %c1_38 = arith.constant 1 : index
    %56 = vector.load %arg8[%c0_37, %c1_38] : memref<22x22xf32, #tpu.memory_space<vmem>>, vector<16x16xf32>
    %57 = vector.extract_strided_slice %37 {offsets = [0, 1], sizes = [1, 1], strides = [1, 1]} : vector<7x7xf32> to vector<1x1xf32>
    %58 = vector.broadcast %57 : vector<1x1xf32> to vector<16x16xf32>
    %59 = arith.mulf %56, %58 : vector<16x16xf32>
    %60 = arith.addf %55, %59 : vector<16x16xf32>
    %61 = arith.addf %51, %60 : vector<16x16xf32>
    %c0_39 = arith.constant 0 : index
    %c2 = arith.constant 2 : index
    %62 = vector.load %arg7[%c0_39, %c2] : memref<22x22xf32, #tpu.memory_space<vmem>>, vector<16x16xf32>
    %63 = vector.extract_strided_slice %36 {offsets = [0, 2], sizes = [1, 1], strides = [1, 1]} : vector<7x7xf32> to vector<1x1xf32>
    %64 = vector.broadcast %63 : vector<1x1xf32> to vector<16x16xf32>
    %65 = arith.mulf %62, %64 : vector<16x16xf32>
    %c0_40 = arith.constant 0 : index
    %c2_41 = arith.constant 2 : index
    %66 = vector.load %arg8[%c0_40, %c2_41] : memref<22x22xf32, #tpu.memory_space<vmem>>, vector<16x16xf32>
    %67 = vector.extract_strided_slice %37 {offsets = [0, 2], sizes = [1, 1], strides = [1, 1]} : vector<7x7xf32> to vector<1x1xf32>
    %68 = vector.broadcast %67 : vector<1x1xf32> to vector<16x16xf32>
    %69 = arith.mulf %66, %68 : vector<16x16xf32>
    %70 = arith.addf %65, %69 : vector<16x16xf32>
    %71 = arith.addf %61, %70 : vector<16x16xf32>
    %c0_42 = arith.constant 0 : index
    %c3_43 = arith.constant 3 : index
    %72 = vector.load %arg7[%c0_42, %c3_43] : memref<22x22xf32, #tpu.memory_space<vmem>>, vector<16x16xf32>
    %73 = vector.extract_strided_slice %36 {offsets = [0, 3], sizes = [1, 1], strides = [1, 1]} : vector<7x7xf32> to vector<1x1xf32>
    %74 = vector.broadcast %73 : vector<1x1xf32> to vector<16x16xf32>
    %75 = arith.mulf %72, %74 : vector<16x16xf32>
    %c0_44 = arith.constant 0 : index
    %c3_45 = arith.constant 3 : index
    %76 = vector.load %arg8[%c0_44, %c3_45] : memref<22x22xf32, #tpu.memory_space<vmem>>, vector<16x16xf32>
    %77 = vector.extract_strided_slice %37 {offsets = [0, 3], sizes = [1, 1], strides = [1, 1]} : vector<7x7xf32> to vector<1x1xf32>
    %78 = vector.broadcast %77 : vector<1x1xf32> to vector<16x16xf32>
    %79 = arith.mulf %76, %78 : vector<16x16xf32>
    %80 = arith.addf %75, %79 : vector<16x16xf32>
    %81 = arith.addf %71, %80 : vector<16x16xf32>
    %c0_46 = arith.constant 0 : index
    %c4 = arith.constant 4 : index
    %82 = vector.load %arg7[%c0_46, %c4] : memref<22x22xf32, #tpu.memory_space<vmem>>, vector<16x16xf32>
    %83 = vector.extract_strided_slice %36 {offsets = [0, 4], sizes = [1, 1], strides = [1, 1]} : vector<7x7xf32> to vector<1x1xf32>
    %84 = vector.broadcast %83 : vector<1x1xf32> to vector<16x16xf32>
    %85 = arith.mulf %82, %84 : vector<16x16xf32>
    %c0_47 = arith.constant 0 : index
    %c4_48 = arith.constant 4 : index
    %86 = vector.load %arg8[%c0_47, %c4_48] : memref<22x22xf32, #tpu.memory_space<vmem>>, vector<16x16xf32>
    %87 = vector.extract_strided_slice %37 {offsets = [0, 4], sizes = [1, 1], strides = [1, 1]} : vector<7x7xf32> to vector<1x1xf32>
    %88 = vector.broadcast %87 : vector<1x1xf32> to vector<16x16xf32>
    %89 = arith.mulf %86, %88 : vector<16x16xf32>
    %90 = arith.addf %85, %89 : vector<16x16xf32>
    %91 = arith.addf %81, %90 : vector<16x16xf32>
    %c0_49 = arith.constant 0 : index
    %c5 = arith.constant 5 : index
    %92 = vector.load %arg7[%c0_49, %c5] : memref<22x22xf32, #tpu.memory_space<vmem>>, vector<16x16xf32>
    %93 = vector.extract_strided_slice %36 {offsets = [0, 5], sizes = [1, 1], strides = [1, 1]} : vector<7x7xf32> to vector<1x1xf32>
    %94 = vector.broadcast %93 : vector<1x1xf32> to vector<16x16xf32>
    %95 = arith.mulf %92, %94 : vector<16x16xf32>
    %c0_50 = arith.constant 0 : index
    %c5_51 = arith.constant 5 : index
    %96 = vector.load %arg8[%c0_50, %c5_51] : memref<22x22xf32, #tpu.memory_space<vmem>>, vector<16x16xf32>
    %97 = vector.extract_strided_slice %37 {offsets = [0, 5], sizes = [1, 1], strides = [1, 1]} : vector<7x7xf32> to vector<1x1xf32>
    %98 = vector.broadcast %97 : vector<1x1xf32> to vector<16x16xf32>
    %99 = arith.mulf %96, %98 : vector<16x16xf32>
    %100 = arith.addf %95, %99 : vector<16x16xf32>
    %101 = arith.addf %91, %100 : vector<16x16xf32>
    %c0_52 = arith.constant 0 : index
    %c6 = arith.constant 6 : index
    %102 = vector.load %arg7[%c0_52, %c6] : memref<22x22xf32, #tpu.memory_space<vmem>>, vector<16x16xf32>
    %103 = vector.extract_strided_slice %36 {offsets = [0, 6], sizes = [1, 1], strides = [1, 1]} : vector<7x7xf32> to vector<1x1xf32>
    %104 = vector.broadcast %103 : vector<1x1xf32> to vector<16x16xf32>
    %105 = arith.mulf %102, %104 : vector<16x16xf32>
    %c0_53 = arith.constant 0 : index
    %c6_54 = arith.constant 6 : index
    %106 = vector.load %arg8[%c0_53, %c6_54] : memref<22x22xf32, #tpu.memory_space<vmem>>, vector<16x16xf32>
    %107 = vector.extract_strided_slice %37 {offsets = [0, 6], sizes = [1, 1], strides = [1, 1]} : vector<7x7xf32> to vector<1x1xf32>
    %108 = vector.broadcast %107 : vector<1x1xf32> to vector<16x16xf32>
    %109 = arith.mulf %106, %108 : vector<16x16xf32>
    %110 = arith.addf %105, %109 : vector<16x16xf32>
    %111 = arith.addf %101, %110 : vector<16x16xf32>
    %c1_55 = arith.constant 1 : index
    %c0_56 = arith.constant 0 : index
    %112 = vector.load %arg7[%c1_55, %c0_56] : memref<22x22xf32, #tpu.memory_space<vmem>>, vector<16x16xf32>
    %113 = vector.extract_strided_slice %36 {offsets = [1, 0], sizes = [1, 1], strides = [1, 1]} : vector<7x7xf32> to vector<1x1xf32>
    %114 = vector.broadcast %113 : vector<1x1xf32> to vector<16x16xf32>
    %115 = arith.mulf %112, %114 : vector<16x16xf32>
    %c1_57 = arith.constant 1 : index
    %c0_58 = arith.constant 0 : index
    %116 = vector.load %arg8[%c1_57, %c0_58] : memref<22x22xf32, #tpu.memory_space<vmem>>, vector<16x16xf32>
    %117 = vector.extract_strided_slice %37 {offsets = [1, 0], sizes = [1, 1], strides = [1, 1]} : vector<7x7xf32> to vector<1x1xf32>
    %118 = vector.broadcast %117 : vector<1x1xf32> to vector<16x16xf32>
    %119 = arith.mulf %116, %118 : vector<16x16xf32>
    %120 = arith.addf %115, %119 : vector<16x16xf32>
    %121 = arith.addf %111, %120 : vector<16x16xf32>
    %c1_59 = arith.constant 1 : index
    %c1_60 = arith.constant 1 : index
    %122 = vector.load %arg7[%c1_59, %c1_60] : memref<22x22xf32, #tpu.memory_space<vmem>>, vector<16x16xf32>
    %123 = vector.extract_strided_slice %36 {offsets = [1, 1], sizes = [1, 1], strides = [1, 1]} : vector<7x7xf32> to vector<1x1xf32>
    %124 = vector.broadcast %123 : vector<1x1xf32> to vector<16x16xf32>
    %125 = arith.mulf %122, %124 : vector<16x16xf32>
    %c1_61 = arith.constant 1 : index
    %c1_62 = arith.constant 1 : index
    %126 = vector.load %arg8[%c1_61, %c1_62] : memref<22x22xf32, #tpu.memory_space<vmem>>, vector<16x16xf32>
    %127 = vector.extract_strided_slice %37 {offsets = [1, 1], sizes = [1, 1], strides = [1, 1]} : vector<7x7xf32> to vector<1x1xf32>
    %128 = vector.broadcast %127 : vector<1x1xf32> to vector<16x16xf32>
    %129 = arith.mulf %126, %128 : vector<16x16xf32>
    %130 = arith.addf %125, %129 : vector<16x16xf32>
    %131 = arith.addf %121, %130 : vector<16x16xf32>
    %c1_63 = arith.constant 1 : index
    %c2_64 = arith.constant 2 : index
    %132 = vector.load %arg7[%c1_63, %c2_64] : memref<22x22xf32, #tpu.memory_space<vmem>>, vector<16x16xf32>
    %133 = vector.extract_strided_slice %36 {offsets = [1, 2], sizes = [1, 1], strides = [1, 1]} : vector<7x7xf32> to vector<1x1xf32>
    %134 = vector.broadcast %133 : vector<1x1xf32> to vector<16x16xf32>
    %135 = arith.mulf %132, %134 : vector<16x16xf32>
    %c1_65 = arith.constant 1 : index
    %c2_66 = arith.constant 2 : index
    %136 = vector.load %arg8[%c1_65, %c2_66] : memref<22x22xf32, #tpu.memory_space<vmem>>, vector<16x16xf32>
    %137 = vector.extract_strided_slice %37 {offsets = [1, 2], sizes = [1, 1], strides = [1, 1]} : vector<7x7xf32> to vector<1x1xf32>
    %138 = vector.broadcast %137 : vector<1x1xf32> to vector<16x16xf32>
    %139 = arith.mulf %136, %138 : vector<16x16xf32>
    %140 = arith.addf %135, %139 : vector<16x16xf32>
    %141 = arith.addf %131, %140 : vector<16x16xf32>
    %c1_67 = arith.constant 1 : index
    %c3_68 = arith.constant 3 : index
    %142 = vector.load %arg7[%c1_67, %c3_68] : memref<22x22xf32, #tpu.memory_space<vmem>>, vector<16x16xf32>
    %143 = vector.extract_strided_slice %36 {offsets = [1, 3], sizes = [1, 1], strides = [1, 1]} : vector<7x7xf32> to vector<1x1xf32>
    %144 = vector.broadcast %143 : vector<1x1xf32> to vector<16x16xf32>
    %145 = arith.mulf %142, %144 : vector<16x16xf32>
    %c1_69 = arith.constant 1 : index
    %c3_70 = arith.constant 3 : index
    %146 = vector.load %arg8[%c1_69, %c3_70] : memref<22x22xf32, #tpu.memory_space<vmem>>, vector<16x16xf32>
    %147 = vector.extract_strided_slice %37 {offsets = [1, 3], sizes = [1, 1], strides = [1, 1]} : vector<7x7xf32> to vector<1x1xf32>
    %148 = vector.broadcast %147 : vector<1x1xf32> to vector<16x16xf32>
    %149 = arith.mulf %146, %148 : vector<16x16xf32>
    %150 = arith.addf %145, %149 : vector<16x16xf32>
    %151 = arith.addf %141, %150 : vector<16x16xf32>
    %c1_71 = arith.constant 1 : index
    %c4_72 = arith.constant 4 : index
    %152 = vector.load %arg7[%c1_71, %c4_72] : memref<22x22xf32, #tpu.memory_space<vmem>>, vector<16x16xf32>
    %153 = vector.extract_strided_slice %36 {offsets = [1, 4], sizes = [1, 1], strides = [1, 1]} : vector<7x7xf32> to vector<1x1xf32>
    %154 = vector.broadcast %153 : vector<1x1xf32> to vector<16x16xf32>
    %155 = arith.mulf %152, %154 : vector<16x16xf32>
    %c1_73 = arith.constant 1 : index
    %c4_74 = arith.constant 4 : index
    %156 = vector.load %arg8[%c1_73, %c4_74] : memref<22x22xf32, #tpu.memory_space<vmem>>, vector<16x16xf32>
    %157 = vector.extract_strided_slice %37 {offsets = [1, 4], sizes = [1, 1], strides = [1, 1]} : vector<7x7xf32> to vector<1x1xf32>
    %158 = vector.broadcast %157 : vector<1x1xf32> to vector<16x16xf32>
    %159 = arith.mulf %156, %158 : vector<16x16xf32>
    %160 = arith.addf %155, %159 : vector<16x16xf32>
    %161 = arith.addf %151, %160 : vector<16x16xf32>
    %c1_75 = arith.constant 1 : index
    %c5_76 = arith.constant 5 : index
    %162 = vector.load %arg7[%c1_75, %c5_76] : memref<22x22xf32, #tpu.memory_space<vmem>>, vector<16x16xf32>
    %163 = vector.extract_strided_slice %36 {offsets = [1, 5], sizes = [1, 1], strides = [1, 1]} : vector<7x7xf32> to vector<1x1xf32>
    %164 = vector.broadcast %163 : vector<1x1xf32> to vector<16x16xf32>
    %165 = arith.mulf %162, %164 : vector<16x16xf32>
    %c1_77 = arith.constant 1 : index
    %c5_78 = arith.constant 5 : index
    %166 = vector.load %arg8[%c1_77, %c5_78] : memref<22x22xf32, #tpu.memory_space<vmem>>, vector<16x16xf32>
    %167 = vector.extract_strided_slice %37 {offsets = [1, 5], sizes = [1, 1], strides = [1, 1]} : vector<7x7xf32> to vector<1x1xf32>
    %168 = vector.broadcast %167 : vector<1x1xf32> to vector<16x16xf32>
    %169 = arith.mulf %166, %168 : vector<16x16xf32>
    %170 = arith.addf %165, %169 : vector<16x16xf32>
    %171 = arith.addf %161, %170 : vector<16x16xf32>
    %c1_79 = arith.constant 1 : index
    %c6_80 = arith.constant 6 : index
    %172 = vector.load %arg7[%c1_79, %c6_80] : memref<22x22xf32, #tpu.memory_space<vmem>>, vector<16x16xf32>
    %173 = vector.extract_strided_slice %36 {offsets = [1, 6], sizes = [1, 1], strides = [1, 1]} : vector<7x7xf32> to vector<1x1xf32>
    %174 = vector.broadcast %173 : vector<1x1xf32> to vector<16x16xf32>
    %175 = arith.mulf %172, %174 : vector<16x16xf32>
    %c1_81 = arith.constant 1 : index
    %c6_82 = arith.constant 6 : index
    %176 = vector.load %arg8[%c1_81, %c6_82] : memref<22x22xf32, #tpu.memory_space<vmem>>, vector<16x16xf32>
    %177 = vector.extract_strided_slice %37 {offsets = [1, 6], sizes = [1, 1], strides = [1, 1]} : vector<7x7xf32> to vector<1x1xf32>
    %178 = vector.broadcast %177 : vector<1x1xf32> to vector<16x16xf32>
    %179 = arith.mulf %176, %178 : vector<16x16xf32>
    %180 = arith.addf %175, %179 : vector<16x16xf32>
    %181 = arith.addf %171, %180 : vector<16x16xf32>
    %c2_83 = arith.constant 2 : index
    %c0_84 = arith.constant 0 : index
    %182 = vector.load %arg7[%c2_83, %c0_84] : memref<22x22xf32, #tpu.memory_space<vmem>>, vector<16x16xf32>
    %183 = vector.extract_strided_slice %36 {offsets = [2, 0], sizes = [1, 1], strides = [1, 1]} : vector<7x7xf32> to vector<1x1xf32>
    %184 = vector.broadcast %183 : vector<1x1xf32> to vector<16x16xf32>
    %185 = arith.mulf %182, %184 : vector<16x16xf32>
    %c2_85 = arith.constant 2 : index
    %c0_86 = arith.constant 0 : index
    %186 = vector.load %arg8[%c2_85, %c0_86] : memref<22x22xf32, #tpu.memory_space<vmem>>, vector<16x16xf32>
    %187 = vector.extract_strided_slice %37 {offsets = [2, 0], sizes = [1, 1], strides = [1, 1]} : vector<7x7xf32> to vector<1x1xf32>
    %188 = vector.broadcast %187 : vector<1x1xf32> to vector<16x16xf32>
    %189 = arith.mulf %186, %188 : vector<16x16xf32>
    %190 = arith.addf %185, %189 : vector<16x16xf32>
    %191 = arith.addf %181, %190 : vector<16x16xf32>
    %c2_87 = arith.constant 2 : index
    %c1_88 = arith.constant 1 : index
    %192 = vector.load %arg7[%c2_87, %c1_88] : memref<22x22xf32, #tpu.memory_space<vmem>>, vector<16x16xf32>
    %193 = vector.extract_strided_slice %36 {offsets = [2, 1], sizes = [1, 1], strides = [1, 1]} : vector<7x7xf32> to vector<1x1xf32>
    %194 = vector.broadcast %193 : vector<1x1xf32> to vector<16x16xf32>
    %195 = arith.mulf %192, %194 : vector<16x16xf32>
    %c2_89 = arith.constant 2 : index
    %c1_90 = arith.constant 1 : index
    %196 = vector.load %arg8[%c2_89, %c1_90] : memref<22x22xf32, #tpu.memory_space<vmem>>, vector<16x16xf32>
    %197 = vector.extract_strided_slice %37 {offsets = [2, 1], sizes = [1, 1], strides = [1, 1]} : vector<7x7xf32> to vector<1x1xf32>
    %198 = vector.broadcast %197 : vector<1x1xf32> to vector<16x16xf32>
    %199 = arith.mulf %196, %198 : vector<16x16xf32>
    %200 = arith.addf %195, %199 : vector<16x16xf32>
    %201 = arith.addf %191, %200 : vector<16x16xf32>
    %c2_91 = arith.constant 2 : index
    %c2_92 = arith.constant 2 : index
    %202 = vector.load %arg7[%c2_91, %c2_92] : memref<22x22xf32, #tpu.memory_space<vmem>>, vector<16x16xf32>
    %203 = vector.extract_strided_slice %36 {offsets = [2, 2], sizes = [1, 1], strides = [1, 1]} : vector<7x7xf32> to vector<1x1xf32>
    %204 = vector.broadcast %203 : vector<1x1xf32> to vector<16x16xf32>
    %205 = arith.mulf %202, %204 : vector<16x16xf32>
    %c2_93 = arith.constant 2 : index
    %c2_94 = arith.constant 2 : index
    %206 = vector.load %arg8[%c2_93, %c2_94] : memref<22x22xf32, #tpu.memory_space<vmem>>, vector<16x16xf32>
    %207 = vector.extract_strided_slice %37 {offsets = [2, 2], sizes = [1, 1], strides = [1, 1]} : vector<7x7xf32> to vector<1x1xf32>
    %208 = vector.broadcast %207 : vector<1x1xf32> to vector<16x16xf32>
    %209 = arith.mulf %206, %208 : vector<16x16xf32>
    %210 = arith.addf %205, %209 : vector<16x16xf32>
    %211 = arith.addf %201, %210 : vector<16x16xf32>
    %c2_95 = arith.constant 2 : index
    %c3_96 = arith.constant 3 : index
    %212 = vector.load %arg7[%c2_95, %c3_96] : memref<22x22xf32, #tpu.memory_space<vmem>>, vector<16x16xf32>
    %213 = vector.extract_strided_slice %36 {offsets = [2, 3], sizes = [1, 1], strides = [1, 1]} : vector<7x7xf32> to vector<1x1xf32>
    %214 = vector.broadcast %213 : vector<1x1xf32> to vector<16x16xf32>
    %215 = arith.mulf %212, %214 : vector<16x16xf32>
    %c2_97 = arith.constant 2 : index
    %c3_98 = arith.constant 3 : index
    %216 = vector.load %arg8[%c2_97, %c3_98] : memref<22x22xf32, #tpu.memory_space<vmem>>, vector<16x16xf32>
    %217 = vector.extract_strided_slice %37 {offsets = [2, 3], sizes = [1, 1], strides = [1, 1]} : vector<7x7xf32> to vector<1x1xf32>
    %218 = vector.broadcast %217 : vector<1x1xf32> to vector<16x16xf32>
    %219 = arith.mulf %216, %218 : vector<16x16xf32>
    %220 = arith.addf %215, %219 : vector<16x16xf32>
    %221 = arith.addf %211, %220 : vector<16x16xf32>
    %c2_99 = arith.constant 2 : index
    %c4_100 = arith.constant 4 : index
    %222 = vector.load %arg7[%c2_99, %c4_100] : memref<22x22xf32, #tpu.memory_space<vmem>>, vector<16x16xf32>
    %223 = vector.extract_strided_slice %36 {offsets = [2, 4], sizes = [1, 1], strides = [1, 1]} : vector<7x7xf32> to vector<1x1xf32>
    %224 = vector.broadcast %223 : vector<1x1xf32> to vector<16x16xf32>
    %225 = arith.mulf %222, %224 : vector<16x16xf32>
    %c2_101 = arith.constant 2 : index
    %c4_102 = arith.constant 4 : index
    %226 = vector.load %arg8[%c2_101, %c4_102] : memref<22x22xf32, #tpu.memory_space<vmem>>, vector<16x16xf32>
    %227 = vector.extract_strided_slice %37 {offsets = [2, 4], sizes = [1, 1], strides = [1, 1]} : vector<7x7xf32> to vector<1x1xf32>
    %228 = vector.broadcast %227 : vector<1x1xf32> to vector<16x16xf32>
    %229 = arith.mulf %226, %228 : vector<16x16xf32>
    %230 = arith.addf %225, %229 : vector<16x16xf32>
    %231 = arith.addf %221, %230 : vector<16x16xf32>
    %c2_103 = arith.constant 2 : index
    %c5_104 = arith.constant 5 : index
    %232 = vector.load %arg7[%c2_103, %c5_104] : memref<22x22xf32, #tpu.memory_space<vmem>>, vector<16x16xf32>
    %233 = vector.extract_strided_slice %36 {offsets = [2, 5], sizes = [1, 1], strides = [1, 1]} : vector<7x7xf32> to vector<1x1xf32>
    %234 = vector.broadcast %233 : vector<1x1xf32> to vector<16x16xf32>
    %235 = arith.mulf %232, %234 : vector<16x16xf32>
    %c2_105 = arith.constant 2 : index
    %c5_106 = arith.constant 5 : index
    %236 = vector.load %arg8[%c2_105, %c5_106] : memref<22x22xf32, #tpu.memory_space<vmem>>, vector<16x16xf32>
    %237 = vector.extract_strided_slice %37 {offsets = [2, 5], sizes = [1, 1], strides = [1, 1]} : vector<7x7xf32> to vector<1x1xf32>
    %238 = vector.broadcast %237 : vector<1x1xf32> to vector<16x16xf32>
    %239 = arith.mulf %236, %238 : vector<16x16xf32>
    %240 = arith.addf %235, %239 : vector<16x16xf32>
    %241 = arith.addf %231, %240 : vector<16x16xf32>
    %c2_107 = arith.constant 2 : index
    %c6_108 = arith.constant 6 : index
    %242 = vector.load %arg7[%c2_107, %c6_108] : memref<22x22xf32, #tpu.memory_space<vmem>>, vector<16x16xf32>
    %243 = vector.extract_strided_slice %36 {offsets = [2, 6], sizes = [1, 1], strides = [1, 1]} : vector<7x7xf32> to vector<1x1xf32>
    %244 = vector.broadcast %243 : vector<1x1xf32> to vector<16x16xf32>
    %245 = arith.mulf %242, %244 : vector<16x16xf32>
    %c2_109 = arith.constant 2 : index
    %c6_110 = arith.constant 6 : index
    %246 = vector.load %arg8[%c2_109, %c6_110] : memref<22x22xf32, #tpu.memory_space<vmem>>, vector<16x16xf32>
    %247 = vector.extract_strided_slice %37 {offsets = [2, 6], sizes = [1, 1], strides = [1, 1]} : vector<7x7xf32> to vector<1x1xf32>
    %248 = vector.broadcast %247 : vector<1x1xf32> to vector<16x16xf32>
    %249 = arith.mulf %246, %248 : vector<16x16xf32>
    %250 = arith.addf %245, %249 : vector<16x16xf32>
    %251 = arith.addf %241, %250 : vector<16x16xf32>
    %c3_111 = arith.constant 3 : index
    %c0_112 = arith.constant 0 : index
    %252 = vector.load %arg7[%c3_111, %c0_112] : memref<22x22xf32, #tpu.memory_space<vmem>>, vector<16x16xf32>
    %253 = vector.extract_strided_slice %36 {offsets = [3, 0], sizes = [1, 1], strides = [1, 1]} : vector<7x7xf32> to vector<1x1xf32>
    %254 = vector.broadcast %253 : vector<1x1xf32> to vector<16x16xf32>
    %255 = arith.mulf %252, %254 : vector<16x16xf32>
    %c3_113 = arith.constant 3 : index
    %c0_114 = arith.constant 0 : index
    %256 = vector.load %arg8[%c3_113, %c0_114] : memref<22x22xf32, #tpu.memory_space<vmem>>, vector<16x16xf32>
    %257 = vector.extract_strided_slice %37 {offsets = [3, 0], sizes = [1, 1], strides = [1, 1]} : vector<7x7xf32> to vector<1x1xf32>
    %258 = vector.broadcast %257 : vector<1x1xf32> to vector<16x16xf32>
    %259 = arith.mulf %256, %258 : vector<16x16xf32>
    %260 = arith.addf %255, %259 : vector<16x16xf32>
    %261 = arith.addf %251, %260 : vector<16x16xf32>
    %c3_115 = arith.constant 3 : index
    %c1_116 = arith.constant 1 : index
    %262 = vector.load %arg7[%c3_115, %c1_116] : memref<22x22xf32, #tpu.memory_space<vmem>>, vector<16x16xf32>
    %263 = vector.extract_strided_slice %36 {offsets = [3, 1], sizes = [1, 1], strides = [1, 1]} : vector<7x7xf32> to vector<1x1xf32>
    %264 = vector.broadcast %263 : vector<1x1xf32> to vector<16x16xf32>
    %265 = arith.mulf %262, %264 : vector<16x16xf32>
    %c3_117 = arith.constant 3 : index
    %c1_118 = arith.constant 1 : index
    %266 = vector.load %arg8[%c3_117, %c1_118] : memref<22x22xf32, #tpu.memory_space<vmem>>, vector<16x16xf32>
    %267 = vector.extract_strided_slice %37 {offsets = [3, 1], sizes = [1, 1], strides = [1, 1]} : vector<7x7xf32> to vector<1x1xf32>
    %268 = vector.broadcast %267 : vector<1x1xf32> to vector<16x16xf32>
    %269 = arith.mulf %266, %268 : vector<16x16xf32>
    %270 = arith.addf %265, %269 : vector<16x16xf32>
    %271 = arith.addf %261, %270 : vector<16x16xf32>
    %c3_119 = arith.constant 3 : index
    %c2_120 = arith.constant 2 : index
    %272 = vector.load %arg7[%c3_119, %c2_120] : memref<22x22xf32, #tpu.memory_space<vmem>>, vector<16x16xf32>
    %273 = vector.extract_strided_slice %36 {offsets = [3, 2], sizes = [1, 1], strides = [1, 1]} : vector<7x7xf32> to vector<1x1xf32>
    %274 = vector.broadcast %273 : vector<1x1xf32> to vector<16x16xf32>
    %275 = arith.mulf %272, %274 : vector<16x16xf32>
    %c3_121 = arith.constant 3 : index
    %c2_122 = arith.constant 2 : index
    %276 = vector.load %arg8[%c3_121, %c2_122] : memref<22x22xf32, #tpu.memory_space<vmem>>, vector<16x16xf32>
    %277 = vector.extract_strided_slice %37 {offsets = [3, 2], sizes = [1, 1], strides = [1, 1]} : vector<7x7xf32> to vector<1x1xf32>
    %278 = vector.broadcast %277 : vector<1x1xf32> to vector<16x16xf32>
    %279 = arith.mulf %276, %278 : vector<16x16xf32>
    %280 = arith.addf %275, %279 : vector<16x16xf32>
    %281 = arith.addf %271, %280 : vector<16x16xf32>
    %c3_123 = arith.constant 3 : index
    %c3_124 = arith.constant 3 : index
    %282 = vector.load %arg7[%c3_123, %c3_124] : memref<22x22xf32, #tpu.memory_space<vmem>>, vector<16x16xf32>
    %283 = vector.extract_strided_slice %36 {offsets = [3, 3], sizes = [1, 1], strides = [1, 1]} : vector<7x7xf32> to vector<1x1xf32>
    %284 = vector.broadcast %283 : vector<1x1xf32> to vector<16x16xf32>
    %285 = arith.mulf %282, %284 : vector<16x16xf32>
    %c3_125 = arith.constant 3 : index
    %c3_126 = arith.constant 3 : index
    %286 = vector.load %arg8[%c3_125, %c3_126] : memref<22x22xf32, #tpu.memory_space<vmem>>, vector<16x16xf32>
    %287 = vector.extract_strided_slice %37 {offsets = [3, 3], sizes = [1, 1], strides = [1, 1]} : vector<7x7xf32> to vector<1x1xf32>
    %288 = vector.broadcast %287 : vector<1x1xf32> to vector<16x16xf32>
    %289 = arith.mulf %286, %288 : vector<16x16xf32>
    %290 = arith.addf %285, %289 : vector<16x16xf32>
    %291 = arith.addf %281, %290 : vector<16x16xf32>
    %c3_127 = arith.constant 3 : index
    %c4_128 = arith.constant 4 : index
    %292 = vector.load %arg7[%c3_127, %c4_128] : memref<22x22xf32, #tpu.memory_space<vmem>>, vector<16x16xf32>
    %293 = vector.extract_strided_slice %36 {offsets = [3, 4], sizes = [1, 1], strides = [1, 1]} : vector<7x7xf32> to vector<1x1xf32>
    %294 = vector.broadcast %293 : vector<1x1xf32> to vector<16x16xf32>
    %295 = arith.mulf %292, %294 : vector<16x16xf32>
    %c3_129 = arith.constant 3 : index
    %c4_130 = arith.constant 4 : index
    %296 = vector.load %arg8[%c3_129, %c4_130] : memref<22x22xf32, #tpu.memory_space<vmem>>, vector<16x16xf32>
    %297 = vector.extract_strided_slice %37 {offsets = [3, 4], sizes = [1, 1], strides = [1, 1]} : vector<7x7xf32> to vector<1x1xf32>
    %298 = vector.broadcast %297 : vector<1x1xf32> to vector<16x16xf32>
    %299 = arith.mulf %296, %298 : vector<16x16xf32>
    %300 = arith.addf %295, %299 : vector<16x16xf32>
    %301 = arith.addf %291, %300 : vector<16x16xf32>
    %c3_131 = arith.constant 3 : index
    %c5_132 = arith.constant 5 : index
    %302 = vector.load %arg7[%c3_131, %c5_132] : memref<22x22xf32, #tpu.memory_space<vmem>>, vector<16x16xf32>
    %303 = vector.extract_strided_slice %36 {offsets = [3, 5], sizes = [1, 1], strides = [1, 1]} : vector<7x7xf32> to vector<1x1xf32>
    %304 = vector.broadcast %303 : vector<1x1xf32> to vector<16x16xf32>
    %305 = arith.mulf %302, %304 : vector<16x16xf32>
    %c3_133 = arith.constant 3 : index
    %c5_134 = arith.constant 5 : index
    %306 = vector.load %arg8[%c3_133, %c5_134] : memref<22x22xf32, #tpu.memory_space<vmem>>, vector<16x16xf32>
    %307 = vector.extract_strided_slice %37 {offsets = [3, 5], sizes = [1, 1], strides = [1, 1]} : vector<7x7xf32> to vector<1x1xf32>
    %308 = vector.broadcast %307 : vector<1x1xf32> to vector<16x16xf32>
    %309 = arith.mulf %306, %308 : vector<16x16xf32>
    %310 = arith.addf %305, %309 : vector<16x16xf32>
    %311 = arith.addf %301, %310 : vector<16x16xf32>
    %c3_135 = arith.constant 3 : index
    %c6_136 = arith.constant 6 : index
    %312 = vector.load %arg7[%c3_135, %c6_136] : memref<22x22xf32, #tpu.memory_space<vmem>>, vector<16x16xf32>
    %313 = vector.extract_strided_slice %36 {offsets = [3, 6], sizes = [1, 1], strides = [1, 1]} : vector<7x7xf32> to vector<1x1xf32>
    %314 = vector.broadcast %313 : vector<1x1xf32> to vector<16x16xf32>
    %315 = arith.mulf %312, %314 : vector<16x16xf32>
    %c3_137 = arith.constant 3 : index
    %c6_138 = arith.constant 6 : index
    %316 = vector.load %arg8[%c3_137, %c6_138] : memref<22x22xf32, #tpu.memory_space<vmem>>, vector<16x16xf32>
    %317 = vector.extract_strided_slice %37 {offsets = [3, 6], sizes = [1, 1], strides = [1, 1]} : vector<7x7xf32> to vector<1x1xf32>
    %318 = vector.broadcast %317 : vector<1x1xf32> to vector<16x16xf32>
    %319 = arith.mulf %316, %318 : vector<16x16xf32>
    %320 = arith.addf %315, %319 : vector<16x16xf32>
    %321 = arith.addf %311, %320 : vector<16x16xf32>
    %c4_139 = arith.constant 4 : index
    %c0_140 = arith.constant 0 : index
    %322 = vector.load %arg7[%c4_139, %c0_140] : memref<22x22xf32, #tpu.memory_space<vmem>>, vector<16x16xf32>
    %323 = vector.extract_strided_slice %36 {offsets = [4, 0], sizes = [1, 1], strides = [1, 1]} : vector<7x7xf32> to vector<1x1xf32>
    %324 = vector.broadcast %323 : vector<1x1xf32> to vector<16x16xf32>
    %325 = arith.mulf %322, %324 : vector<16x16xf32>
    %c4_141 = arith.constant 4 : index
    %c0_142 = arith.constant 0 : index
    %326 = vector.load %arg8[%c4_141, %c0_142] : memref<22x22xf32, #tpu.memory_space<vmem>>, vector<16x16xf32>
    %327 = vector.extract_strided_slice %37 {offsets = [4, 0], sizes = [1, 1], strides = [1, 1]} : vector<7x7xf32> to vector<1x1xf32>
    %328 = vector.broadcast %327 : vector<1x1xf32> to vector<16x16xf32>
    %329 = arith.mulf %326, %328 : vector<16x16xf32>
    %330 = arith.addf %325, %329 : vector<16x16xf32>
    %331 = arith.addf %321, %330 : vector<16x16xf32>
    %c4_143 = arith.constant 4 : index
    %c1_144 = arith.constant 1 : index
    %332 = vector.load %arg7[%c4_143, %c1_144] : memref<22x22xf32, #tpu.memory_space<vmem>>, vector<16x16xf32>
    %333 = vector.extract_strided_slice %36 {offsets = [4, 1], sizes = [1, 1], strides = [1, 1]} : vector<7x7xf32> to vector<1x1xf32>
    %334 = vector.broadcast %333 : vector<1x1xf32> to vector<16x16xf32>
    %335 = arith.mulf %332, %334 : vector<16x16xf32>
    %c4_145 = arith.constant 4 : index
    %c1_146 = arith.constant 1 : index
    %336 = vector.load %arg8[%c4_145, %c1_146] : memref<22x22xf32, #tpu.memory_space<vmem>>, vector<16x16xf32>
    %337 = vector.extract_strided_slice %37 {offsets = [4, 1], sizes = [1, 1], strides = [1, 1]} : vector<7x7xf32> to vector<1x1xf32>
    %338 = vector.broadcast %337 : vector<1x1xf32> to vector<16x16xf32>
    %339 = arith.mulf %336, %338 : vector<16x16xf32>
    %340 = arith.addf %335, %339 : vector<16x16xf32>
    %341 = arith.addf %331, %340 : vector<16x16xf32>
    %c4_147 = arith.constant 4 : index
    %c2_148 = arith.constant 2 : index
    %342 = vector.load %arg7[%c4_147, %c2_148] : memref<22x22xf32, #tpu.memory_space<vmem>>, vector<16x16xf32>
    %343 = vector.extract_strided_slice %36 {offsets = [4, 2], sizes = [1, 1], strides = [1, 1]} : vector<7x7xf32> to vector<1x1xf32>
    %344 = vector.broadcast %343 : vector<1x1xf32> to vector<16x16xf32>
    %345 = arith.mulf %342, %344 : vector<16x16xf32>
    %c4_149 = arith.constant 4 : index
    %c2_150 = arith.constant 2 : index
    %346 = vector.load %arg8[%c4_149, %c2_150] : memref<22x22xf32, #tpu.memory_space<vmem>>, vector<16x16xf32>
    %347 = vector.extract_strided_slice %37 {offsets = [4, 2], sizes = [1, 1], strides = [1, 1]} : vector<7x7xf32> to vector<1x1xf32>
    %348 = vector.broadcast %347 : vector<1x1xf32> to vector<16x16xf32>
    %349 = arith.mulf %346, %348 : vector<16x16xf32>
    %350 = arith.addf %345, %349 : vector<16x16xf32>
    %351 = arith.addf %341, %350 : vector<16x16xf32>
    %c4_151 = arith.constant 4 : index
    %c3_152 = arith.constant 3 : index
    %352 = vector.load %arg7[%c4_151, %c3_152] : memref<22x22xf32, #tpu.memory_space<vmem>>, vector<16x16xf32>
    %353 = vector.extract_strided_slice %36 {offsets = [4, 3], sizes = [1, 1], strides = [1, 1]} : vector<7x7xf32> to vector<1x1xf32>
    %354 = vector.broadcast %353 : vector<1x1xf32> to vector<16x16xf32>
    %355 = arith.mulf %352, %354 : vector<16x16xf32>
    %c4_153 = arith.constant 4 : index
    %c3_154 = arith.constant 3 : index
    %356 = vector.load %arg8[%c4_153, %c3_154] : memref<22x22xf32, #tpu.memory_space<vmem>>, vector<16x16xf32>
    %357 = vector.extract_strided_slice %37 {offsets = [4, 3], sizes = [1, 1], strides = [1, 1]} : vector<7x7xf32> to vector<1x1xf32>
    %358 = vector.broadcast %357 : vector<1x1xf32> to vector<16x16xf32>
    %359 = arith.mulf %356, %358 : vector<16x16xf32>
    %360 = arith.addf %355, %359 : vector<16x16xf32>
    %361 = arith.addf %351, %360 : vector<16x16xf32>
    %c4_155 = arith.constant 4 : index
    %c4_156 = arith.constant 4 : index
    %362 = vector.load %arg7[%c4_155, %c4_156] : memref<22x22xf32, #tpu.memory_space<vmem>>, vector<16x16xf32>
    %363 = vector.extract_strided_slice %36 {offsets = [4, 4], sizes = [1, 1], strides = [1, 1]} : vector<7x7xf32> to vector<1x1xf32>
    %364 = vector.broadcast %363 : vector<1x1xf32> to vector<16x16xf32>
    %365 = arith.mulf %362, %364 : vector<16x16xf32>
    %c4_157 = arith.constant 4 : index
    %c4_158 = arith.constant 4 : index
    %366 = vector.load %arg8[%c4_157, %c4_158] : memref<22x22xf32, #tpu.memory_space<vmem>>, vector<16x16xf32>
    %367 = vector.extract_strided_slice %37 {offsets = [4, 4], sizes = [1, 1], strides = [1, 1]} : vector<7x7xf32> to vector<1x1xf32>
    %368 = vector.broadcast %367 : vector<1x1xf32> to vector<16x16xf32>
    %369 = arith.mulf %366, %368 : vector<16x16xf32>
    %370 = arith.addf %365, %369 : vector<16x16xf32>
    %371 = arith.addf %361, %370 : vector<16x16xf32>
    %c4_159 = arith.constant 4 : index
    %c5_160 = arith.constant 5 : index
    %372 = vector.load %arg7[%c4_159, %c5_160] : memref<22x22xf32, #tpu.memory_space<vmem>>, vector<16x16xf32>
    %373 = vector.extract_strided_slice %36 {offsets = [4, 5], sizes = [1, 1], strides = [1, 1]} : vector<7x7xf32> to vector<1x1xf32>
    %374 = vector.broadcast %373 : vector<1x1xf32> to vector<16x16xf32>
    %375 = arith.mulf %372, %374 : vector<16x16xf32>
    %c4_161 = arith.constant 4 : index
    %c5_162 = arith.constant 5 : index
    %376 = vector.load %arg8[%c4_161, %c5_162] : memref<22x22xf32, #tpu.memory_space<vmem>>, vector<16x16xf32>
    %377 = vector.extract_strided_slice %37 {offsets = [4, 5], sizes = [1, 1], strides = [1, 1]} : vector<7x7xf32> to vector<1x1xf32>
    %378 = vector.broadcast %377 : vector<1x1xf32> to vector<16x16xf32>
    %379 = arith.mulf %376, %378 : vector<16x16xf32>
    %380 = arith.addf %375, %379 : vector<16x16xf32>
    %381 = arith.addf %371, %380 : vector<16x16xf32>
    %c4_163 = arith.constant 4 : index
    %c6_164 = arith.constant 6 : index
    %382 = vector.load %arg7[%c4_163, %c6_164] : memref<22x22xf32, #tpu.memory_space<vmem>>, vector<16x16xf32>
    %383 = vector.extract_strided_slice %36 {offsets = [4, 6], sizes = [1, 1], strides = [1, 1]} : vector<7x7xf32> to vector<1x1xf32>
    %384 = vector.broadcast %383 : vector<1x1xf32> to vector<16x16xf32>
    %385 = arith.mulf %382, %384 : vector<16x16xf32>
    %c4_165 = arith.constant 4 : index
    %c6_166 = arith.constant 6 : index
    %386 = vector.load %arg8[%c4_165, %c6_166] : memref<22x22xf32, #tpu.memory_space<vmem>>, vector<16x16xf32>
    %387 = vector.extract_strided_slice %37 {offsets = [4, 6], sizes = [1, 1], strides = [1, 1]} : vector<7x7xf32> to vector<1x1xf32>
    %388 = vector.broadcast %387 : vector<1x1xf32> to vector<16x16xf32>
    %389 = arith.mulf %386, %388 : vector<16x16xf32>
    %390 = arith.addf %385, %389 : vector<16x16xf32>
    %391 = arith.addf %381, %390 : vector<16x16xf32>
    %c5_167 = arith.constant 5 : index
    %c0_168 = arith.constant 0 : index
    %392 = vector.load %arg7[%c5_167, %c0_168] : memref<22x22xf32, #tpu.memory_space<vmem>>, vector<16x16xf32>
    %393 = vector.extract_strided_slice %36 {offsets = [5, 0], sizes = [1, 1], strides = [1, 1]} : vector<7x7xf32> to vector<1x1xf32>
    %394 = vector.broadcast %393 : vector<1x1xf32> to vector<16x16xf32>
    %395 = arith.mulf %392, %394 : vector<16x16xf32>
    %c5_169 = arith.constant 5 : index
    %c0_170 = arith.constant 0 : index
    %396 = vector.load %arg8[%c5_169, %c0_170] : memref<22x22xf32, #tpu.memory_space<vmem>>, vector<16x16xf32>
    %397 = vector.extract_strided_slice %37 {offsets = [5, 0], sizes = [1, 1], strides = [1, 1]} : vector<7x7xf32> to vector<1x1xf32>
    %398 = vector.broadcast %397 : vector<1x1xf32> to vector<16x16xf32>
    %399 = arith.mulf %396, %398 : vector<16x16xf32>
    %400 = arith.addf %395, %399 : vector<16x16xf32>
    %401 = arith.addf %391, %400 : vector<16x16xf32>
    %c5_171 = arith.constant 5 : index
    %c1_172 = arith.constant 1 : index
    %402 = vector.load %arg7[%c5_171, %c1_172] : memref<22x22xf32, #tpu.memory_space<vmem>>, vector<16x16xf32>
    %403 = vector.extract_strided_slice %36 {offsets = [5, 1], sizes = [1, 1], strides = [1, 1]} : vector<7x7xf32> to vector<1x1xf32>
    %404 = vector.broadcast %403 : vector<1x1xf32> to vector<16x16xf32>
    %405 = arith.mulf %402, %404 : vector<16x16xf32>
    %c5_173 = arith.constant 5 : index
    %c1_174 = arith.constant 1 : index
    %406 = vector.load %arg8[%c5_173, %c1_174] : memref<22x22xf32, #tpu.memory_space<vmem>>, vector<16x16xf32>
    %407 = vector.extract_strided_slice %37 {offsets = [5, 1], sizes = [1, 1], strides = [1, 1]} : vector<7x7xf32> to vector<1x1xf32>
    %408 = vector.broadcast %407 : vector<1x1xf32> to vector<16x16xf32>
    %409 = arith.mulf %406, %408 : vector<16x16xf32>
    %410 = arith.addf %405, %409 : vector<16x16xf32>
    %411 = arith.addf %401, %410 : vector<16x16xf32>
    %c5_175 = arith.constant 5 : index
    %c2_176 = arith.constant 2 : index
    %412 = vector.load %arg7[%c5_175, %c2_176] : memref<22x22xf32, #tpu.memory_space<vmem>>, vector<16x16xf32>
    %413 = vector.extract_strided_slice %36 {offsets = [5, 2], sizes = [1, 1], strides = [1, 1]} : vector<7x7xf32> to vector<1x1xf32>
    %414 = vector.broadcast %413 : vector<1x1xf32> to vector<16x16xf32>
    %415 = arith.mulf %412, %414 : vector<16x16xf32>
    %c5_177 = arith.constant 5 : index
    %c2_178 = arith.constant 2 : index
    %416 = vector.load %arg8[%c5_177, %c2_178] : memref<22x22xf32, #tpu.memory_space<vmem>>, vector<16x16xf32>
    %417 = vector.extract_strided_slice %37 {offsets = [5, 2], sizes = [1, 1], strides = [1, 1]} : vector<7x7xf32> to vector<1x1xf32>
    %418 = vector.broadcast %417 : vector<1x1xf32> to vector<16x16xf32>
    %419 = arith.mulf %416, %418 : vector<16x16xf32>
    %420 = arith.addf %415, %419 : vector<16x16xf32>
    %421 = arith.addf %411, %420 : vector<16x16xf32>
    %c5_179 = arith.constant 5 : index
    %c3_180 = arith.constant 3 : index
    %422 = vector.load %arg7[%c5_179, %c3_180] : memref<22x22xf32, #tpu.memory_space<vmem>>, vector<16x16xf32>
    %423 = vector.extract_strided_slice %36 {offsets = [5, 3], sizes = [1, 1], strides = [1, 1]} : vector<7x7xf32> to vector<1x1xf32>
    %424 = vector.broadcast %423 : vector<1x1xf32> to vector<16x16xf32>
    %425 = arith.mulf %422, %424 : vector<16x16xf32>
    %c5_181 = arith.constant 5 : index
    %c3_182 = arith.constant 3 : index
    %426 = vector.load %arg8[%c5_181, %c3_182] : memref<22x22xf32, #tpu.memory_space<vmem>>, vector<16x16xf32>
    %427 = vector.extract_strided_slice %37 {offsets = [5, 3], sizes = [1, 1], strides = [1, 1]} : vector<7x7xf32> to vector<1x1xf32>
    %428 = vector.broadcast %427 : vector<1x1xf32> to vector<16x16xf32>
    %429 = arith.mulf %426, %428 : vector<16x16xf32>
    %430 = arith.addf %425, %429 : vector<16x16xf32>
    %431 = arith.addf %421, %430 : vector<16x16xf32>
    %c5_183 = arith.constant 5 : index
    %c4_184 = arith.constant 4 : index
    %432 = vector.load %arg7[%c5_183, %c4_184] : memref<22x22xf32, #tpu.memory_space<vmem>>, vector<16x16xf32>
    %433 = vector.extract_strided_slice %36 {offsets = [5, 4], sizes = [1, 1], strides = [1, 1]} : vector<7x7xf32> to vector<1x1xf32>
    %434 = vector.broadcast %433 : vector<1x1xf32> to vector<16x16xf32>
    %435 = arith.mulf %432, %434 : vector<16x16xf32>
    %c5_185 = arith.constant 5 : index
    %c4_186 = arith.constant 4 : index
    %436 = vector.load %arg8[%c5_185, %c4_186] : memref<22x22xf32, #tpu.memory_space<vmem>>, vector<16x16xf32>
    %437 = vector.extract_strided_slice %37 {offsets = [5, 4], sizes = [1, 1], strides = [1, 1]} : vector<7x7xf32> to vector<1x1xf32>
    %438 = vector.broadcast %437 : vector<1x1xf32> to vector<16x16xf32>
    %439 = arith.mulf %436, %438 : vector<16x16xf32>
    %440 = arith.addf %435, %439 : vector<16x16xf32>
    %441 = arith.addf %431, %440 : vector<16x16xf32>
    %c5_187 = arith.constant 5 : index
    %c5_188 = arith.constant 5 : index
    %442 = vector.load %arg7[%c5_187, %c5_188] : memref<22x22xf32, #tpu.memory_space<vmem>>, vector<16x16xf32>
    %443 = vector.extract_strided_slice %36 {offsets = [5, 5], sizes = [1, 1], strides = [1, 1]} : vector<7x7xf32> to vector<1x1xf32>
    %444 = vector.broadcast %443 : vector<1x1xf32> to vector<16x16xf32>
    %445 = arith.mulf %442, %444 : vector<16x16xf32>
    %c5_189 = arith.constant 5 : index
    %c5_190 = arith.constant 5 : index
    %446 = vector.load %arg8[%c5_189, %c5_190] : memref<22x22xf32, #tpu.memory_space<vmem>>, vector<16x16xf32>
    %447 = vector.extract_strided_slice %37 {offsets = [5, 5], sizes = [1, 1], strides = [1, 1]} : vector<7x7xf32> to vector<1x1xf32>
    %448 = vector.broadcast %447 : vector<1x1xf32> to vector<16x16xf32>
    %449 = arith.mulf %446, %448 : vector<16x16xf32>
    %450 = arith.addf %445, %449 : vector<16x16xf32>
    %451 = arith.addf %441, %450 : vector<16x16xf32>
    %c5_191 = arith.constant 5 : index
    %c6_192 = arith.constant 6 : index
    %452 = vector.load %arg7[%c5_191, %c6_192] : memref<22x22xf32, #tpu.memory_space<vmem>>, vector<16x16xf32>
    %453 = vector.extract_strided_slice %36 {offsets = [5, 6], sizes = [1, 1], strides = [1, 1]} : vector<7x7xf32> to vector<1x1xf32>
    %454 = vector.broadcast %453 : vector<1x1xf32> to vector<16x16xf32>
    %455 = arith.mulf %452, %454 : vector<16x16xf32>
    %c5_193 = arith.constant 5 : index
    %c6_194 = arith.constant 6 : index
    %456 = vector.load %arg8[%c5_193, %c6_194] : memref<22x22xf32, #tpu.memory_space<vmem>>, vector<16x16xf32>
    %457 = vector.extract_strided_slice %37 {offsets = [5, 6], sizes = [1, 1], strides = [1, 1]} : vector<7x7xf32> to vector<1x1xf32>
    %458 = vector.broadcast %457 : vector<1x1xf32> to vector<16x16xf32>
    %459 = arith.mulf %456, %458 : vector<16x16xf32>
    %460 = arith.addf %455, %459 : vector<16x16xf32>
    %461 = arith.addf %451, %460 : vector<16x16xf32>
    %c6_195 = arith.constant 6 : index
    %c0_196 = arith.constant 0 : index
    %462 = vector.load %arg7[%c6_195, %c0_196] : memref<22x22xf32, #tpu.memory_space<vmem>>, vector<16x16xf32>
    %463 = vector.extract_strided_slice %36 {offsets = [6, 0], sizes = [1, 1], strides = [1, 1]} : vector<7x7xf32> to vector<1x1xf32>
    %464 = vector.broadcast %463 : vector<1x1xf32> to vector<16x16xf32>
    %465 = arith.mulf %462, %464 : vector<16x16xf32>
    %c6_197 = arith.constant 6 : index
    %c0_198 = arith.constant 0 : index
    %466 = vector.load %arg8[%c6_197, %c0_198] : memref<22x22xf32, #tpu.memory_space<vmem>>, vector<16x16xf32>
    %467 = vector.extract_strided_slice %37 {offsets = [6, 0], sizes = [1, 1], strides = [1, 1]} : vector<7x7xf32> to vector<1x1xf32>
    %468 = vector.broadcast %467 : vector<1x1xf32> to vector<16x16xf32>
    %469 = arith.mulf %466, %468 : vector<16x16xf32>
    %470 = arith.addf %465, %469 : vector<16x16xf32>
    %471 = arith.addf %461, %470 : vector<16x16xf32>
    %c6_199 = arith.constant 6 : index
    %c1_200 = arith.constant 1 : index
    %472 = vector.load %arg7[%c6_199, %c1_200] : memref<22x22xf32, #tpu.memory_space<vmem>>, vector<16x16xf32>
    %473 = vector.extract_strided_slice %36 {offsets = [6, 1], sizes = [1, 1], strides = [1, 1]} : vector<7x7xf32> to vector<1x1xf32>
    %474 = vector.broadcast %473 : vector<1x1xf32> to vector<16x16xf32>
    %475 = arith.mulf %472, %474 : vector<16x16xf32>
    %c6_201 = arith.constant 6 : index
    %c1_202 = arith.constant 1 : index
    %476 = vector.load %arg8[%c6_201, %c1_202] : memref<22x22xf32, #tpu.memory_space<vmem>>, vector<16x16xf32>
    %477 = vector.extract_strided_slice %37 {offsets = [6, 1], sizes = [1, 1], strides = [1, 1]} : vector<7x7xf32> to vector<1x1xf32>
    %478 = vector.broadcast %477 : vector<1x1xf32> to vector<16x16xf32>
    %479 = arith.mulf %476, %478 : vector<16x16xf32>
    %480 = arith.addf %475, %479 : vector<16x16xf32>
    %481 = arith.addf %471, %480 : vector<16x16xf32>
    %c6_203 = arith.constant 6 : index
    %c2_204 = arith.constant 2 : index
    %482 = vector.load %arg7[%c6_203, %c2_204] : memref<22x22xf32, #tpu.memory_space<vmem>>, vector<16x16xf32>
    %483 = vector.extract_strided_slice %36 {offsets = [6, 2], sizes = [1, 1], strides = [1, 1]} : vector<7x7xf32> to vector<1x1xf32>
    %484 = vector.broadcast %483 : vector<1x1xf32> to vector<16x16xf32>
    %485 = arith.mulf %482, %484 : vector<16x16xf32>
    %c6_205 = arith.constant 6 : index
    %c2_206 = arith.constant 2 : index
    %486 = vector.load %arg8[%c6_205, %c2_206] : memref<22x22xf32, #tpu.memory_space<vmem>>, vector<16x16xf32>
    %487 = vector.extract_strided_slice %37 {offsets = [6, 2], sizes = [1, 1], strides = [1, 1]} : vector<7x7xf32> to vector<1x1xf32>
    %488 = vector.broadcast %487 : vector<1x1xf32> to vector<16x16xf32>
    %489 = arith.mulf %486, %488 : vector<16x16xf32>
    %490 = arith.addf %485, %489 : vector<16x16xf32>
    %491 = arith.addf %481, %490 : vector<16x16xf32>
    %c6_207 = arith.constant 6 : index
    %c3_208 = arith.constant 3 : index
    %492 = vector.load %arg7[%c6_207, %c3_208] : memref<22x22xf32, #tpu.memory_space<vmem>>, vector<16x16xf32>
    %493 = vector.extract_strided_slice %36 {offsets = [6, 3], sizes = [1, 1], strides = [1, 1]} : vector<7x7xf32> to vector<1x1xf32>
    %494 = vector.broadcast %493 : vector<1x1xf32> to vector<16x16xf32>
    %495 = arith.mulf %492, %494 : vector<16x16xf32>
    %c6_209 = arith.constant 6 : index
    %c3_210 = arith.constant 3 : index
    %496 = vector.load %arg8[%c6_209, %c3_210] : memref<22x22xf32, #tpu.memory_space<vmem>>, vector<16x16xf32>
    %497 = vector.extract_strided_slice %37 {offsets = [6, 3], sizes = [1, 1], strides = [1, 1]} : vector<7x7xf32> to vector<1x1xf32>
    %498 = vector.broadcast %497 : vector<1x1xf32> to vector<16x16xf32>
    %499 = arith.mulf %496, %498 : vector<16x16xf32>
    %500 = arith.addf %495, %499 : vector<16x16xf32>
    %501 = arith.addf %491, %500 : vector<16x16xf32>
    %c6_211 = arith.constant 6 : index
    %c4_212 = arith.constant 4 : index
    %502 = vector.load %arg7[%c6_211, %c4_212] : memref<22x22xf32, #tpu.memory_space<vmem>>, vector<16x16xf32>
    %503 = vector.extract_strided_slice %36 {offsets = [6, 4], sizes = [1, 1], strides = [1, 1]} : vector<7x7xf32> to vector<1x1xf32>
    %504 = vector.broadcast %503 : vector<1x1xf32> to vector<16x16xf32>
    %505 = arith.mulf %502, %504 : vector<16x16xf32>
    %c6_213 = arith.constant 6 : index
    %c4_214 = arith.constant 4 : index
    %506 = vector.load %arg8[%c6_213, %c4_214] : memref<22x22xf32, #tpu.memory_space<vmem>>, vector<16x16xf32>
    %507 = vector.extract_strided_slice %37 {offsets = [6, 4], sizes = [1, 1], strides = [1, 1]} : vector<7x7xf32> to vector<1x1xf32>
    %508 = vector.broadcast %507 : vector<1x1xf32> to vector<16x16xf32>
    %509 = arith.mulf %506, %508 : vector<16x16xf32>
    %510 = arith.addf %505, %509 : vector<16x16xf32>
    %511 = arith.addf %501, %510 : vector<16x16xf32>
    %c6_215 = arith.constant 6 : index
    %c5_216 = arith.constant 5 : index
    %512 = vector.load %arg7[%c6_215, %c5_216] : memref<22x22xf32, #tpu.memory_space<vmem>>, vector<16x16xf32>
    %513 = vector.extract_strided_slice %36 {offsets = [6, 5], sizes = [1, 1], strides = [1, 1]} : vector<7x7xf32> to vector<1x1xf32>
    %514 = vector.broadcast %513 : vector<1x1xf32> to vector<16x16xf32>
    %515 = arith.mulf %512, %514 : vector<16x16xf32>
    %c6_217 = arith.constant 6 : index
    %c5_218 = arith.constant 5 : index
    %516 = vector.load %arg8[%c6_217, %c5_218] : memref<22x22xf32, #tpu.memory_space<vmem>>, vector<16x16xf32>
    %517 = vector.extract_strided_slice %37 {offsets = [6, 5], sizes = [1, 1], strides = [1, 1]} : vector<7x7xf32> to vector<1x1xf32>
    %518 = vector.broadcast %517 : vector<1x1xf32> to vector<16x16xf32>
    %519 = arith.mulf %516, %518 : vector<16x16xf32>
    %520 = arith.addf %515, %519 : vector<16x16xf32>
    %521 = arith.addf %511, %520 : vector<16x16xf32>
    %c6_219 = arith.constant 6 : index
    %c6_220 = arith.constant 6 : index
    %522 = vector.load %arg7[%c6_219, %c6_220] : memref<22x22xf32, #tpu.memory_space<vmem>>, vector<16x16xf32>
    %523 = vector.extract_strided_slice %36 {offsets = [6, 6], sizes = [1, 1], strides = [1, 1]} : vector<7x7xf32> to vector<1x1xf32>
    %524 = vector.broadcast %523 : vector<1x1xf32> to vector<16x16xf32>
    %525 = arith.mulf %522, %524 : vector<16x16xf32>
    %c6_221 = arith.constant 6 : index
    %c6_222 = arith.constant 6 : index
    %526 = vector.load %arg8[%c6_221, %c6_222] : memref<22x22xf32, #tpu.memory_space<vmem>>, vector<16x16xf32>
    %527 = vector.extract_strided_slice %37 {offsets = [6, 6], sizes = [1, 1], strides = [1, 1]} : vector<7x7xf32> to vector<1x1xf32>
    %528 = vector.broadcast %527 : vector<1x1xf32> to vector<16x16xf32>
    %529 = arith.mulf %526, %528 : vector<16x16xf32>
    %530 = arith.addf %525, %529 : vector<16x16xf32>
    %531 = arith.addf %521, %530 : vector<16x16xf32>
    %cst_223 = arith.constant 0.000000e+00 : f32
    %532 = vector.broadcast %cst_223 : f32 to vector<16x16xf32>
    %533 = arith.subf %532, %531 : vector<16x16xf32>
    %534 = math.exp %533 : vector<16x16xf32>
    %cst_224 = arith.constant 1.000000e+00 : f32
    %535 = vector.broadcast %cst_224 : f32 to vector<16x16xf32>
    %536 = arith.addf %535, %534 : vector<16x16xf32>
    %cst_225 = arith.constant 1.000000e+00 : f32
    %537 = vector.broadcast %cst_225 : f32 to vector<16x16xf32>
    %538 = arith.divf %537, %536 : vector<16x16xf32>
    %539 = vector.shape_cast %538 : vector<16x16xf32> to vector<1x16x16xf32>
    %540 = vector.broadcast %539 : vector<1x16x16xf32> to vector<4x16x16xf32>
    %541 = arith.mulf %25, %540 : vector<4x16x16xf32>
    %542 = arith.addf %541, %1 : vector<4x16x16xf32>
    %c0_226 = arith.constant 0 : index
    %c0_227 = arith.constant 0 : index
    %c0_228 = arith.constant 0 : index
    %c0_229 = arith.constant 0 : index
    %543 = vector.load %arg6[%c0_226, %c0_227, %c0_228, %c0_229] : memref<1x4x16x16xf32, #tpu.memory_space<vmem>>, vector<1x4x16x16xf32>
    %544 = vector.shape_cast %543 : vector<1x4x16x16xf32> to vector<4x16x16xf32>
    %545 = vector.shape_cast %542 : vector<4x16x16xf32> to vector<1x4x16x16xf32>
    tpu.vector_store %arg6[%c0_226, %c0_227, %c0_228, %c0_229], %545 {strides = array<i32>} : memref<1x4x16x16xf32, #tpu.memory_space<vmem>>, vector<1x4x16x16xf32>,
    return
  }
  func.func @transform_0(%arg0: i32) -> (i32, i32, i32, i32) {
    %c0_i32 = arith.constant 0 : i32
    %c0_i32_0 = arith.constant 0 : i32
    %c0_i32_1 = arith.constant 0 : i32
    %c0_i32_2 = arith.constant 0 : i32
    return %arg0, %c0_i32, %c0_i32_0, %c0_i32_1 : i32, i32, i32, i32
  }
  func.func @transform_1(%arg0: i32) -> (i32, i32) {
    %c0_i32 = arith.constant 0 : i32
    %c0_i32_0 = arith.constant 0 : i32
    %c0_i32_1 = arith.constant 0 : i32
    return %c0_i32, %c0_i32_0 : i32, i32
  }
  func.func @transform_2(%arg0: i32) -> (i32, i32) {
    %c0_i32 = arith.constant 0 : i32
    %c0_i32_0 = arith.constant 0 : i32
    %c0_i32_1 = arith.constant 0 : i32
    return %c0_i32, %c0_i32_0 : i32, i32
  }
  func.func @transform_3(%arg0: i32) -> (i32, i32) {
    %c0_i32 = arith.constant 0 : i32
    %c0_i32_0 = arith.constant 0 : i32
    %c0_i32_1 = arith.constant 0 : i32
    return %c0_i32, %c0_i32_0 : i32, i32
  }
  func.func @transform_4(%arg0: i32) -> (i32, i32) {
    %c0_i32 = arith.constant 0 : i32
    %c0_i32_0 = arith.constant 0 : i32
    %c0_i32_1 = arith.constant 0 : i32
    return %c0_i32, %c0_i32_0 : i32, i32
  }
  func.func @transform_5(%arg0: i32) -> (i32, i32, i32, i32) {
    %c0_i32 = arith.constant 0 : i32
    %c0_i32_0 = arith.constant 0 : i32
    %c0_i32_1 = arith.constant 0 : i32
    %c0_i32_2 = arith.constant 0 : i32
    return %arg0, %c0_i32, %c0_i32_0, %c0_i32_1 : i32, i32, i32, i32
  }
}

</mosaic_0001>

<llo_original>
// kernel: tpu_custom_call.1
$region0: #{tpu_custom_call.1}
  #allocation0 [shape = 'u32[]', space=smem, size = 0x4, offset = 0x4, fixed_abs, tag = 'smem constant byte address 0x4 - core index']
  #allocation1 [shape = 'u32[144,128]{1,0:T(1,128)}', space=vmem, size = 0x12000, scoped, tag = 'internal scratch']
  #allocation2 [shape = 'f32[22,22]{1,0:T(8,128)}', space=vmem, size = 0x3000, scoped, tag = 'scratch operand']
  #allocation3 [shape = 'f32[22,22]{1,0:T(8,128)}', space=vmem, size = 0x3000, scoped, tag = 'scratch operand']
  #allocation4 [shape = 'f32[1,1]{1,0:T(1,128)S(1)}', space=vmem, size = 0x200, scoped, tag = 'scoped memory for tpu_custom_call.1']
  %s0 = inlined_call_operand.hbm [shape: f32[2,4,16,16], index: 0, kind: input, shape index: {}]
  %s1 = inlined_call_operand.hbm [shape: f32[4,4], index: 1, kind: input, shape index: {}]
  %s2 = inlined_call_operand.vmem [shape: f32[7,7], index: 2, kind: input, shape index: {}]
  %s3 = inlined_call_operand.hbm [shape: f32[7,7], index: 3, kind: input, shape index: {}]
  %s4 = inlined_call_operand.<no memory space> [shape: f32[1,1], index: 4, kind: input, shape index: {}]
  %s5 = inlined_call_operand.hbm [shape: f32[2,4,16,16], index: 5, kind: output, shape index: {}]
  %s6 = sld [smem:[#allocation0]]
  $region65: #{tpu_custom_call.1} parent=0
    _
  %s8 = ssub.s32 1, %s6
  %s9 = scalar_select 0, %s8, %s6
  %v10 = vstv %s4
  %11 = vst [vmem:[#allocation4] sm:$0x1] %v10
  $region1: #{tpu_custom_call.1} parent=0
    #allocation5 [shape = 'u8[65536]{0}', space=vmem, size = 0x10000, scoped, tag = 'input window, operand 0']
    #allocation6 [shape = 's32[2]{0}', space=sflag, size = 0x8, scoped, tag = 'scoped memory for tpu_custom_call.1']
    #allocation7 [shape = 's32[2]{0}', space=sflag, size = 0x8, scoped, tag = 'scoped memory for tpu_custom_call.1']
    #allocation8 [shape = 'u8[2048]{0}', space=vmem, size = 0x800, scoped, tag = 'input window, operand 1, single buffered']
    #allocation9 [shape = 's32[1]{0}', space=sflag, size = 0x4, scoped, tag = 'scoped memory for tpu_custom_call.1']
    #allocation10 [shape = 'u8[4096]{0}', space=vmem, size = 0x1000, scoped, tag = 'input window, operand 3, single buffered']
    #allocation11 [shape = 'u8[65536]{0}', space=vmem, size = 0x10000, scoped, tag = 'output window, operand 0']
    %12 = vsyncpa [#allocation6], 0
    %s13 = scalar_lea.sflag [#allocation6], 1
    %14 = vsyncpa %s13, 0
    %15 = vsyncpa [#allocation9], 0
    %16 = vsyncpa [#allocation7], 0
    %s17 = scalar_lea.sflag [#allocation7], 1
    %18 = vsyncpa %s17, 0
    loop: start=0, step=1, limit=4
    $region2: #{tpu_custom_call.1} parent=1 // loop_pre_header
      _
    $region3: #{tpu_custom_call.1} parent=1 // loop_header
      %s20 = sphi 0, %s24
      %p21 = scmp.ge.s32.totalorder %s20, 4
      %s30 = sphi 0, %s32
      %s33 = sphi 0, %s30
      %s34 = sphi 0, %s33
      %s50 = sphi 0, %s34
      %s54 = sphi 0, %s54
      %s56 = sphi 0, %s54
      %s57 = sphi 0, %s56
      %s71 = sphi 0, %s57
      %s75 = sphi 0, %s75
      %s77 = sphi 0, %s75
      %s78 = sphi 0, %s77
      %s92 = sphi 0, %s78
      %s96 = sphi 0, %s96
      %s98 = sphi 0, %s96
      %s99 = sphi 0, %s98
      %s113 = sphi 0, %s99
      %s117 = sphi 0, %s117
      %s119 = sphi 0, %s117
      %s120 = sphi 0, %s119
      %s134 = sphi 0, %s120
      %s140 = sphi 0, %s142
      %s143 = sphi 0, %s140
      %s144 = sphi 0, %s143
      %s160 = sphi 0, %s144
    $region4: #{tpu_custom_call.1} parent=1 // loop_header_branch
      %23 = sbr.rel (%p21) target = $region8
    $region5: #{tpu_custom_call.1} parent=1 // loop_body
      %s25 = ssub.s32 %s20, 1
      %s26 = ssub.s32 %s20, 2
      %s27 = sadd.s32 %s20, 1
      %s28 = ssub.s32 %s20, %s27
      %p29 = scmp.eq.s32.totalorder %s28, 0
      %s31 = sadd.s32 %s30, 1
      %s32 = scalar_select %p29, %s30, %s31
      %p35 = pneg %p29
      %p36 = scmp.eq.s32.totalorder %s20, 1
      %p37 = por %p35, %p36
      %p38 = scmp.ne.s32.totalorder %s30, %s33
      %p39 = scmp.eq.s32.totalorder %s20, 0
      %p40 = por %p38, %p39
      %p41 = scmp.ne.s32.totalorder %s30, %s33
      %p42 = scmp.eq.s32.totalorder %s25, 1
      %p43 = por %p41, %p42
      %p44 = scmp.ne.s32.totalorder %s33, %s34
      %p45 = scmp.eq.s32.totalorder %s25, 0
      %p46 = por %p44, %p45
      %p47 = scmp.ne.s32.totalorder %s33, %s34
      %p48 = scmp.eq.s32.totalorder %s26, 1
      %p49 = por %p47, %p48
      %p51 = scmp.ne.s32.totalorder %s34, %s50
      %p52 = scmp.eq.s32.totalorder %s26, 0
      %p53 = por %p51, %p52
      %s55 = sadd.s32 %s54, 1
      %p58 = scmp.eq.s32.totalorder %s20, 1
      %p59 = scmp.ne.s32.totalorder %s54, %s56
      %p60 = scmp.eq.s32.totalorder %s20, 0
      %p61 = por %p59, %p60
      %p62 = scmp.ne.s32.totalorder %s54, %s56
      %p63 = scmp.eq.s32.totalorder %s25, 1
      %p64 = por %p62, %p63
      %p65 = scmp.ne.s32.totalorder %s56, %s57
      %p66 = scmp.eq.s32.totalorder %s25, 0
      %p67 = por %p65, %p66
      %p68 = scmp.ne.s32.totalorder %s56, %s57
      %p69 = scmp.eq.s32.totalorder %s26, 1
      %p70 = por %p68, %p69
      %p72 = scmp.ne.s32.totalorder %s57, %s71
      %p73 = scmp.eq.s32.totalorder %s26, 0
      %p74 = por %p72, %p73
      %s76 = sadd.s32 %s75, 1
      %p79 = scmp.eq.s32.totalorder %s20, 1
      %p80 = scmp.ne.s32.totalorder %s75, %s77
      %p81 = scmp.eq.s32.totalorder %s20, 0
      %p82 = por %p80, %p81
      %p83 = scmp.ne.s32.totalorder %s75, %s77
      %p84 = scmp.eq.s32.totalorder %s25, 1
      %p85 = por %p83, %p84
      %p86 = scmp.ne.s32.totalorder %s77, %s78
      %p87 = scmp.eq.s32.totalorder %s25, 0
      %p88 = por %p86, %p87
      %p89 = scmp.ne.s32.totalorder %s77, %s78
      %p90 = scmp.eq.s32.totalorder %s26, 1
      %p91 = por %p89, %p90
      %p93 = scmp.ne.s32.totalorder %s78, %s92
      %p94 = scmp.eq.s32.totalorder %s26, 0
      %p95 = por %p93, %p94
      %s97 = sadd.s32 %s96, 1
      %p100 = scmp.eq.s32.totalorder %s20, 1
      %p101 = scmp.ne.s32.totalorder %s96, %s98
      %p102 = scmp.eq.s32.totalorder %s20, 0
      %p103 = por %p101, %p102
      %p104 = scmp.ne.s32.totalorder %s96, %s98
      %p105 = scmp.eq.s32.totalorder %s25, 1
      %p106 = por %p104, %p105
      %p107 = scmp.ne.s32.totalorder %s98, %s99
      %p108 = scmp.eq.s32.totalorder %s25, 0
      %p109 = por %p107, %p108
      %p110 = scmp.ne.s32.totalorder %s98, %s99
      %p111 = scmp.eq.s32.totalorder %s26, 1
      %p112 = por %p110, %p111
      %p114 = scmp.ne.s32.totalorder %s99, %s113
      %p115 = scmp.eq.s32.totalorder %s26, 0
      %p116 = por %p114, %p115
      %s118 = sadd.s32 %s117, 1
      %p121 = scmp.eq.s32.totalorder %s20, 1
      %p122 = scmp.ne.s32.totalorder %s117, %s119
      %p123 = scmp.eq.s32.totalorder %s20, 0
      %p124 = por %p122, %p123
      %p125 = scmp.ne.s32.totalorder %s117, %s119
      %p126 = scmp.eq.s32.totalorder %s25, 1
      %p127 = por %p125, %p126
      %p128 = scmp.ne.s32.totalorder %s119, %s120
      %p129 = scmp.eq.s32.totalorder %s25, 0
      %p130 = por %p128, %p129
      %p131 = scmp.ne.s32.totalorder %s119, %s120
      %p132 = scmp.eq.s32.totalorder %s26, 1
      %p133 = por %p131, %p132
      %p135 = scmp.ne.s32.totalorder %s120, %s134
      %p136 = scmp.eq.s32.totalorder %s26, 0
      %p137 = por %p135, %p136
      %s138 = ssub.s32 %s20, %s27
      %p139 = scmp.eq.s32.totalorder %s138, 0
      %s141 = sadd.s32 %s140, 1
      %s142 = scalar_select %p139, %s140, %s141
      %p145 = pneg %p139
      %p146 = scmp.eq.s32.totalorder %s20, 1
      %p147 = por %p145, %p146
      %p148 = scmp.ne.s32.totalorder %s140, %s143
      %p149 = scmp.eq.s32.totalorder %s20, 0
      %p150 = por %p148, %p149
      %p151 = scmp.ne.s32.totalorder %s140, %s143
      %p152 = scmp.eq.s32.totalorder %s25, 1
      %p153 = por %p151, %p152
      %p154 = scmp.ne.s32.totalorder %s143, %s144
      %p155 = scmp.eq.s32.totalorder %s25, 0
      %p156 = por %p154, %p155
      %p157 = scmp.ne.s32.totalorder %s143, %s144
      %p158 = scmp.eq.s32.totalorder %s26, 1
      %p159 = por %p157, %p158
      %p161 = scmp.ne.s32.totalorder %s144, %s160
      %p162 = scmp.eq.s32.totalorder %s26, 0
      %p163 = por %p161, %p162
      %p164 = scmp.le.s32.totalorder 1, %s20
      %p165 = scmp.lt.s32.totalorder %s20, 3
      %p166 = pnand %p164, %p165
      %p167 = pneg %p166
      // Predicated region
      $region9: #{tpu_custom_call.1} parent=5 // pred_check
        _
      $region10: #{tpu_custom_call.1} parent=5 // pred_check_branch
        %169 = sbr.rel (%p166) target = $region12
      $region11: #{tpu_custom_call.1} parent=5 // pred_region
        %s170 = ssub.s32 %s20, 1
        // Predicated region
        $region13: #{tpu_custom_call.1} parent=11 // pred_check
          %p171 = pneg %p67
        $region14: #{tpu_custom_call.1} parent=11 // pred_check_branch
          %173 = sbr.rel (%p171) target = $region16
        $region15: #{tpu_custom_call.1} parent=11 // pred_region
          %s175 = ssub.s32 64, 64
          %176 = vsyncadd [#allocation9], %s175
          %s178 = sshll.u32 [#allocation8], 4
          %s179 = int_to_ptr.vmem [resolvable:$true] %s178
          %181 = dma.hbm_to_vmem [thread:$0]  %s1, 64, %s179, [#allocation9]
        $region16: #{tpu_custom_call.1} parent=11 // pred_fallthru
          _
        // Predicated region
        $region17: #{tpu_custom_call.1} parent=11 // pred_check
          %p182 = pneg %p88
        $region18: #{tpu_custom_call.1} parent=11 // pred_check_branch
          %184 = sbr.rel (%p182) target = $region20
        $region19: #{tpu_custom_call.1} parent=11 // pred_region
          _
        $region20: #{tpu_custom_call.1} parent=11 // pred_fallthru
          _
        // Predicated region
        $region21: #{tpu_custom_call.1} parent=11 // pred_check
          %p185 = pneg %p109
        $region22: #{tpu_custom_call.1} parent=11 // pred_check_branch
          %187 = sbr.rel (%p185) target = $region24
        $region23: #{tpu_custom_call.1} parent=11 // pred_region
          %s189 = ssub.s32 128, 128
          %190 = vsyncadd [#allocation9], %s189
          %s192 = sshll.u32 [#allocation10], 4
          %s193 = int_to_ptr.vmem [resolvable:$true] %s192
          %195 = dma.hbm_to_vmem [thread:$0]  %s3, 128, %s193, [#allocation9]
        $region24: #{tpu_custom_call.1} parent=11 // pred_fallthru
          _
        // Predicated region
        $region25: #{tpu_custom_call.1} parent=11 // pred_check
          %p196 = pneg %p130
        $region26: #{tpu_custom_call.1} parent=11 // pred_check_branch
          %198 = sbr.rel (%p196) target = $region28
        $region27: #{tpu_custom_call.1} parent=11 // pred_region
          _
        $region28: #{tpu_custom_call.1} parent=11 // pred_fallthru
          _
      $region12: #{tpu_custom_call.1} parent=5 // pred_fallthru
        _
      %p199 = scmp.lt.s32.totalorder %s20, 2
      // Predicated region
      $region29: #{tpu_custom_call.1} parent=5 // pred_check
        %p200 = pneg %p199
      $region30: #{tpu_custom_call.1} parent=5 // pred_check_branch
        %202 = sbr.rel (%p200) target = $region32
      $region31: #{tpu_custom_call.1} parent=5 // pred_region
        // Predicated region
        $region33: #{tpu_custom_call.1} parent=31 // pred_check
          %p203 = pneg %p40
        $region34: #{tpu_custom_call.1} parent=31 // pred_check_branch
          %205 = sbr.rel (%p203) target = $region36
        $region35: #{tpu_custom_call.1} parent=31 // pred_region
          %s206 = sand.u32 %s30, 1
          %s207 = scalar_lea.sflag [#allocation6], %s206
          %s208 = sand.u32 %s30, 1
          %s209 = smul.addr %s208, 64
          %s210 = scalar_lea.vmem [#allocation5], %s209
          %s212 = ssub.s32 1024, 1024
          %213 = vsyncadd %s207, %s212
          %s214 = smul.addr %s20, 8
          %s215 = smul.addr %s214, 128
          %s216 = scalar_lea.hbm %s0, %s215
          %s217 = sshll.u32 %s210, 4
          %s218 = int_to_ptr.vmem [resolvable:$true] %s217
          %223 = dma.hbm_to_vmem [thread:$0]  %s216, 1024, %s218, %s207, 128, 128, 8
        $region36: #{tpu_custom_call.1} parent=31 // pred_fallthru
          _
      $region32: #{tpu_custom_call.1} parent=5 // pred_fallthru
        _
      %p224 = scmp.le.s32.totalorder 1, %s20
      %p225 = scmp.lt.s32.totalorder %s20, 3
      %p226 = pnand %p224, %p225
      %p227 = pneg %p226
      // Predicated region
      $region37: #{tpu_custom_call.1} parent=5 // pred_check
        _
      $region38: #{tpu_custom_call.1} parent=5 // pred_check_branch
        %229 = sbr.rel (%p226) target = $region40
      $region39: #{tpu_custom_call.1} parent=5 // pred_region
        %s230 = ssub.s32 %s20, 1
        %s231 = sand.u32 %s33, 1
        %s232 = scalar_lea.sflag [#allocation6], %s231
        %s233 = sand.u32 %s33, 1
        %s234 = smul.addr %s233, 64
        %s235 = scalar_lea.vmem [#allocation5], %s234
        // Predicated region
        $region41: #{tpu_custom_call.1} parent=39 // pred_check
          %p236 = pneg %p46
        $region42: #{tpu_custom_call.1} parent=39 // pred_check_branch
          %238 = sbr.rel (%p236) target = $region44
        $region43: #{tpu_custom_call.1} parent=39 // pred_region
          %239 = dma.done %s232, 1024
        $region44: #{tpu_custom_call.1} parent=39 // pred_fallthru
          _
        // Predicated region
        $region45: #{tpu_custom_call.1} parent=39 // pred_check
          %p240 = pneg %p67
        $region46: #{tpu_custom_call.1} parent=39 // pred_check_branch
          %242 = sbr.rel (%p240) target = $region48
        $region47: #{tpu_custom_call.1} parent=39 // pred_region
          %243 = dma.done [#allocation9], 64
        $region48: #{tpu_custom_call.1} parent=39 // pred_fallthru
          _
        // Predicated region
        $region49: #{tpu_custom_call.1} parent=39 // pred_check
          %p244 = pneg %p109
        $region50: #{tpu_custom_call.1} parent=39 // pred_check_branch
          %246 = sbr.rel (%p244) target = $region52
        $region51: #{tpu_custom_call.1} parent=39 // pred_region
          %247 = dma.done [#allocation9], 128
        $region52: #{tpu_custom_call.1} parent=39 // pred_fallthru
          _
        %s248 = sand.u32 %s33, 1
        %s249 = scalar_lea.sflag [#allocation6], %s248
        %s250 = sand.u32 %s33, 1
        %s251 = smul.addr %s250, 64
        %s252 = scalar_lea.vmem [#allocation5], %s251
        %p253 = pneg %p46
        %p254 = pneg %p43
        %p255 = pneg %p67
        %p256 = pneg %p64
        %p257 = pneg %p88
        %p258 = pneg %p85
        %p259 = pneg %p109
        %p260 = pneg %p106
        %p261 = pneg %p130
        %p262 = pneg %p127
        %p263 = pneg %p156
        %p264 = pneg %p153
        %s265 = sand.u32 %s143, 1
        %s266 = scalar_lea.sflag [#allocation7], %s265
        %s267 = sand.u32 %s143, 1
        %s268 = smul.addr %s267, 64
        %s269 = scalar_lea.vmem [#allocation11], %s268
        %v270 = vld [vmem:[%s235] sm:$0xff]
        %v271 = vld [vmem:[%s235 + $0x8] sm:$0xff]
        %v272 = vld [vmem:[%s235 + $0x10] sm:$0xff]
        %v273 = vld [vmem:[%s235 + $0x18] sm:$0xff]
        %v274 = vld [vmem:[%s235 + $0x20] sm:$0xff]
        %v275 = vld [vmem:[%s235 + $0x28] sm:$0xff]
        %v276 = vld [vmem:[%s235 + $0x30] sm:$0xff]
        %v277 = vld [vmem:[%s235 + $0x38] sm:$0xff]
        %vm278 = vcmask 130048
        %v279 = vsel %vm278, %v270, 0.0
        %280 = vadd.xlane.f32.xlu0 %v279
        %v281 = vpop.xlane.xlu0 %280
        %v282 = vsel %vm278, %v271, 0.0
        %283 = vadd.xlane.f32.xlu0 %v282
        %v284 = vpop.xlane.xlu0 %283
        %v285 = vsel %vm278, %v272, 0.0
        %286 = vadd.xlane.f32.xlu0 %v285
        %v287 = vpop.xlane.xlu0 %286
        %v288 = vsel %vm278, %v273, 0.0
        %289 = vadd.xlane.f32.xlu0 %v288
        %v290 = vpop.xlane.xlu0 %289
        %v291 = vsel %vm278, %v274, 0.0
        %292 = vadd.xlane.f32.xlu0 %v291
        %v293 = vpop.xlane.xlu0 %292
        %v294 = vsel %vm278, %v275, 0.0
        %295 = vadd.xlane.f32.xlu0 %v294
        %v296 = vpop.xlane.xlu0 %295
        %v297 = vsel %vm278, %v276, 0.0
        %298 = vadd.xlane.f32.xlu0 %v297
        %v299 = vpop.xlane.xlu0 %298
        %v300 = vsel %vm278, %v277, 0.0
        %301 = vadd.xlane.f32.xlu0 %v300
        %v302 = vpop.xlane.xlu0 %301
        %v303 = vadd.f32 %v281, %v284
        %v304 = vrot.slane %v303, 4
        %v305 = vadd.f32 %v303, %v304
        %v306 = vrot.slane %v305, 2
        %v307 = vadd.f32 %v305, %v306
        %v308 = vrot.slane %v307, 1
        %v309 = vadd.f32 %v307, %v308
        %v310 = vadd.f32 %v287, %v290
        %v311 = vrot.slane %v310, 4
        %v312 = vadd.f32 %v310, %v311
        %v313 = vrot.slane %v312, 2
        %v314 = vadd.f32 %v312, %v313
        %v315 = vrot.slane %v314, 1
        %v316 = vadd.f32 %v314, %v315
        %v317 = vadd.f32 %v293, %v296
        %v318 = vrot.slane %v317, 4
        %v319 = vadd.f32 %v317, %v318
        %v320 = vrot.slane %v319, 2
        %v321 = vadd.f32 %v319, %v320
        %v322 = vrot.slane %v321, 1
        %v323 = vadd.f32 %v321, %v322
        %v324 = vadd.f32 %v299, %v302
        %v325 = vrot.slane %v324, 4
        %v326 = vadd.f32 %v324, %v325
        %v327 = vrot.slane %v326, 2
        %v328 = vadd.f32 %v326, %v327
        %v329 = vrot.slane %v328, 1
        %v330 = vadd.f32 %v328, %v329
        %v331 = vrcp.pop 256.0
        %v332 = vmul.f32 %v309, %v331
        %v333 = vmul.f32 %v316, %v331
        %v334 = vmul.f32 %v323, %v331
        %v335 = vmul.f32 %v330, %v331
        %v336 = vsel %vm278, %v270, -inf
        %337 = vmax.xlane.f32.xlu0 %v336
        %v338 = vpop.xlane.xlu0 %337
        %v339 = vsel %vm278, %v271, -inf
        %340 = vmax.xlane.f32.xlu0 %v339
        %v341 = vpop.xlane.xlu0 %340
        %v342 = vsel %vm278, %v272, -inf
        %343 = vmax.xlane.f32.xlu0 %v342
        %v344 = vpop.xlane.xlu0 %343
        %v345 = vsel %vm278, %v273, -inf
        %346 = vmax.xlane.f32.xlu0 %v345
        %v347 = vpop.xlane.xlu0 %346
        %v348 = vsel %vm278, %v274, -inf
        %349 = vmax.xlane.f32.xlu0 %v348
        %v350 = vpop.xlane.xlu0 %349
        %v351 = vsel %vm278, %v275, -inf
        %352 = vmax.xlane.f32.xlu0 %v351
        %v353 = vpop.xlane.xlu0 %352
        %v354 = vsel %vm278, %v276, -inf
        %355 = vmax.xlane.f32.xlu0 %v354
        %v356 = vpop.xlane.xlu0 %355
        %v357 = vsel %vm278, %v277, -inf
        %358 = vmax.xlane.f32.xlu0 %v357
        %v359 = vpop.xlane.xlu0 %358
        %v360 = vmax.f32 %v338, %v341
        %v361 = vrot.slane %v360, 4
        %v362 = vmax.f32 %v360, %v361
        %v363 = vrot.slane %v362, 2
        %v364 = vmax.f32 %v362, %v363
        %v365 = vrot.slane %v364, 1
        %v366 = vmax.f32 %v364, %v365
        %v367 = vmax.f32 %v344, %v347
        %v368 = vrot.slane %v367, 4
        %v369 = vmax.f32 %v367, %v368
        %v370 = vrot.slane %v369, 2
        %v371 = vmax.f32 %v369, %v370
        %v372 = vrot.slane %v371, 1
        %v373 = vmax.f32 %v371, %v372
        %v374 = vmax.f32 %v350, %v353
        %v375 = vrot.slane %v374, 4
        %v376 = vmax.f32 %v374, %v375
        %v377 = vrot.slane %v376, 2
        %v378 = vmax.f32 %v376, %v377
        %v379 = vrot.slane %v378, 1
        %v380 = vmax.f32 %v378, %v379
        %v381 = vmax.f32 %v356, %v359
        %v382 = vrot.slane %v381, 4
        %v383 = vmax.f32 %v381, %v382
        %v384 = vrot.slane %v383, 2
        %v385 = vmax.f32 %v383, %v384
        %v386 = vrot.slane %v385, 1
        %v387 = vmax.f32 %v385, %v386
        %v388 = vadd.f32 %v332, %v366
        %v389 = vadd.f32 %v333, %v373
        %v390 = vadd.f32 %v334, %v380
        %v391 = vadd.f32 %v335, %v387
        %v392 = vld [vmem:[#allocation8] sm:$0xf]
        %vm397 = vcmask 1041409
        %v398 = vsel %vm397, %v389, %v388
        %vm399 = vcmask 1042434
        %v400 = vsel %vm399, %v390, %v398
        %vm401 = vcmask 1043459
        %v402 = vsel %vm401, %v391, %v400
        %vm403 = vcmask 31744
        %v405 = vsel %vm403, %v392, 0
        %vm407 = vcmask 1043456
        %v408 = vsel %vm407, %v402, 0
        %410 = vmatprep.subr.mxu0 0.0
        %411 = vmatpush1.msra.mxu0 %v408
        %412 = vmatprep.subr.mxu0 0.0
        %413 = vmatpush1.msra.mxu0 0.0
        %414 = vmatprep.subr.mxu0 0.0
        %415 = vmatpush1.msra.mxu0 0.0
        %416 = vmatprep.subr.mxu0 0.0
        %417 = vmatpush1.msra.mxu0 0.0
        %418 = vmatprep.subr.mxu0 0.0
        %419 = vmatpush1.msra.mxu0 0.0
        %420 = vmatprep.subr.mxu0 0.0
        %421 = vmatpush1.msra.mxu0 0.0
        %422 = vmatprep.subr.mxu0 0.0
        %423 = vmatpush1.msra.mxu0 0.0
        %424 = vmatprep.subr.mxu0 0.0
        %425 = vmatpush1.msra.mxu0 0.0
        %426 = vmatprep.subr.mxu0 0.0
        %427 = vmatpush1.msra.mxu0 0.0
        %428 = vmatprep.subr.mxu0 0.0
        %429 = vmatpush1.msra.mxu0 0.0
        %430 = vmatprep.subr.mxu0 0.0
        %431 = vmatpush1.msra.mxu0 0.0
        %432 = vmatprep.subr.mxu0 0.0
        %433 = vmatpush1.msra.mxu0 0.0
        %434 = vmatprep.subr.mxu0 0.0
        %435 = vmatpush1.msra.mxu0 0.0
        %436 = vmatprep.subr.mxu0 0.0
        %437 = vmatpush1.msra.mxu0 0.0
        %438 = vmatprep.subr.mxu0 0.0
        %439 = vmatpush1.msra.mxu0 0.0
        %440 = vmatprep.subr.mxu0 0.0
        %441 = vmatpush1.msra.mxu0 0.0
        %442 = vmatprep.subr.mxu0 0.0
        %443 = vmatpush1.msra.mxu0 0.0
        %444 = vmatprep.subr.mxu0 0.0
        %445 = vmatpush1.msra.mxu0 0.0
        %446 = vmatprep.subr.mxu0 0.0
        %447 = vmatpush1.msra.mxu0 0.0
        %448 = vmatprep.subr.mxu0 0.0
        %449 = vmatpush1.msra.mxu0 0.0
        %450 = vmatprep.subr.mxu0 0.0
        %451 = vmatpush1.msra.mxu0 0.0
        %452 = vmatprep.subr.mxu0 0.0
        %453 = vmatpush1.msra.mxu0 0.0
        %454 = vmatprep.subr.mxu0 0.0
        %455 = vmatpush1.msra.mxu0 0.0
        %456 = vmatprep.subr.mxu0 0.0
        %457 = vmatpush1.msra.mxu0 0.0
        %458 = vmatprep.subr.mxu0 0.0
        %459 = vmatpush1.msra.mxu0 0.0
        %460 = vmatprep.subr.mxu0 0.0
        %461 = vmatpush1.msra.mxu0 0.0
        %462 = vmatprep.subr.mxu0 0.0
        %463 = vmatpush1.msra.mxu0 0.0
        %464 = vmatprep.subr.mxu0 0.0
        %465 = vmatpush1.msra.mxu0 0.0
        %466 = vmatprep.subr.mxu0 0.0
        %467 = vmatpush1.msra.mxu0 0.0
        %468 = vmatprep.subr.mxu0 0.0
        %469 = vmatpush1.msra.mxu0 0.0
        %470 = vmatprep.subr.mxu0 0.0
        %471 = vmatpush1.msra.mxu0 0.0
        %472 = vmatprep.subr.mxu0 0.0
        %473 = vmatpush1.msra.mxu0 0.0
        %474 = vmatprep.mubr.f32.mxu0 0.0
        %475 = vmatmul.mubr.f32.gmra.mrb[0].mxu0 %v405
        %v476 = vpop.f32.mrb[0].mxu0
        %v477 = vadd.f32 0.0, %v476
        %v478 = vpop.f32.mrb[0].mxu0
        %479 = vdwg.mxu0
        %v480 = vsub.f32 0.0, %v477
        %v481 = vmul.f32 %v480, 1.442695
        %v482 = vpow.pop %v481
        %v483 = vadd.f32 %v482, 1.0
        %v484 = vrcp.pop %v483
        %v485 = vmul.f32 1.0, %v484
        %v488 = vunpack.c.l.s4 1966171168
        %v489 = vunpack.c.0.s8 %v488
        %v490 = vlaneseq
        %v491 = vshrl.u32 %v490, 7
        %v492 = vsub.s32 %v489, %v491
        %v493 = vrot.slane %v485, %v492
        %v494 = vcombine.high %v493, %v493
        %v496 = vunpack.c.l.s4 1966171168
        %v497 = vunpack.c.0.s8 %v496
        %v498 = vlaneseq
        %v499 = vshrl.u32 %v498, 7
        %v500 = vsub.s32 %v497, %v499
        %v501 = vrot.slane %v493, %v500
        %v503 = vunpack.c.l.s4 1966171168
        %v504 = vunpack.c.0.s8 %v503
        %v505 = vlaneseq
        %v506 = vshrl.u32 %v505, 7
        %v507 = vsub.s32 %v504, %v506
        %v508 = vrot.slane %v494, %v507
        %v509 = vcombine.high %v501, %v501
        %v510 = vcombine.high %v508, %v508
        %v511 = vlaneseq
        %v512 = vshrl.u32 %v511, 7
        %v513 = vsub.s32 0, %v512
        %v514 = vrot.slane %v501, %v513
        %v515 = vlaneseq
        %v516 = vshrl.u32 %v515, 7
        %v517 = vsub.s32 0, %v516
        %v518 = vrot.slane %v508, %v517
        %v519 = vlaneseq
        %v520 = vshrl.u32 %v519, 7
        %v521 = vsub.s32 0, %v520
        %v522 = vrot.slane %v509, %v521
        %v523 = vlaneseq
        %v524 = vshrl.u32 %v523, 7
        %v525 = vsub.s32 0, %v524
        %v526 = vrot.slane %v510, %v525
        %527 = vset.pattern.permute.xlu0 0
        %528 = vperm.xlu0 %527, %v514
        %v529 = vpop.permute.xlu0 %528
        %531 = vset.pattern.permute.xlu0 0
        %532 = vperm.xlu0 %531, %v518
        %v533 = vpop.permute.xlu0 %532
        %535 = vset.pattern.permute.xlu0 0
        %536 = vperm.xlu0 %535, %v522
        %v537 = vpop.permute.xlu0 %536
        %539 = vset.pattern.permute.xlu0 0
        %540 = vperm.xlu0 %539, %v526
        %v541 = vpop.permute.xlu0 %540
        %v543 = vmul.f32 %v270, %v529
        %v544 = vmul.f32 %v271, %v529
        %v545 = vmul.f32 %v272, %v533
        %v546 = vmul.f32 %v273, %v533
        %v547 = vmul.f32 %v274, %v537
        %v548 = vmul.f32 %v275, %v537
        %v549 = vmul.f32 %v276, %v541
        %v550 = vmul.f32 %v277, %v541
        %v551 = vsel %vm278, %v543, -inf
        %v552 = vsel %vm278, %v545, -inf
        %v553 = vsel %vm278, %v547, -inf
        %v554 = vmax.f32 %v551, %v553
        %v555 = vsel %vm278, %v549, -inf
        %v556 = vmax.f32 %v552, %v555
        %v557 = vmax.f32 %v554, %v556
        %v558 = vsel %vm278, %v544, -inf
        %v559 = vsel %vm278, %v546, -inf
        %v560 = vsel %vm278, %v548, -inf
        %v561 = vmax.f32 %v558, %v560
        %v562 = vsel %vm278, %v550, -inf
        %v563 = vmax.f32 %v559, %v562
        %v564 = vmax.f32 %v561, %v563
        %v565 = vsel %vm278, %v543, 0.0
        %v566 = vsel %vm278, %v545, 0.0
        %v567 = vadd.f32 %v565, %v566
        %v568 = vsel %vm278, %v547, 0.0
        %v569 = vadd.f32 %v567, %v568
        %v570 = vsel %vm278, %v549, 0.0
        %v571 = vadd.f32 %v569, %v570
        %v572 = vsel %vm278, %v544, 0.0
        %v573 = vsel %vm278, %v546, 0.0
        %v574 = vadd.f32 %v572, %v573
        %v575 = vsel %vm278, %v548, 0.0
        %v576 = vadd.f32 %v574, %v575
        %v577 = vsel %vm278, %v550, 0.0
        %v578 = vadd.f32 %v576, %v577
        %v579 = vrcp.pop 4.0
        %v580 = vmul.f32 %v571, %v579
        %v581 = vmul.f32 %v578, %v579
        %vm582 = vcmask 179200
        %583 = vst.msk [vmem:[#allocation2] sm:$0xff] %vm582, 0.0
        %584 = vst.msk [vmem:[#allocation2 + $0x8] sm:$0xff] %vm582, 0.0
        %vm585 = vcmask 177152
        %586 = vst.msk [vmem:[#allocation2 + $0x10] sm:$0x3f] %vm585, 0.0
        %587 = vst.msk [vmem:[#allocation3] sm:$0xff] %vm582, 0.0
        %588 = vst.msk [vmem:[#allocation3 + $0x8] sm:$0xff] %vm582, 0.0
        %589 = vst.msk [vmem:[#allocation3 + $0x10] sm:$0x3f] %vm585, 0.0
        %592 = vrot.lane.b32.xlu0 %v557, 3
        %v593 = vpop.permute.xlu0 %592
        %594 = vrot.lane.b32.xlu0 %v564, 3
        %v595 = vpop.permute.xlu0 %594
        %vm598 = vcmask 154648
        %599 = vst.msk [vmem:[#allocation2 + $0x3] sm:$0xff] %vm598, %v593
        %600 = vst.msk [vmem:[#allocation2 + $0xb] sm:$0xff] %vm598, %v595
        %603 = vrot.lane.b32.xlu0 %v580, 3
        %v604 = vpop.permute.xlu0 %603
        %605 = vrot.lane.b32.xlu0 %v581, 3
        %v606 = vpop.permute.xlu0 %605
        %609 = vst.msk [vmem:[#allocation3 + $0x3] sm:$0xff] %vm598, %v604
        %610 = vst.msk [vmem:[#allocation3 + $0xb] sm:$0xff] %vm598, %v606
        %v611 = vld [vmem:[%s2] sm:$0x7f]
        %v612 = vld [vmem:[#allocation10] sm:$0x7f]
        %v613 = vld [vmem:[#allocation4] sm:$0x1]
        %v615 = vlaneseq
        %v616 = vshrl.u32 %v615, 7
        %v617 = vsub.s32 0, %v616
        %v618 = vrot.slane %v613, %v617
        %619 = vset.pattern.permute.xlu0 0
        %620 = vperm.xlu0 %619, %v618
        %v621 = vpop.permute.xlu0 %620
        %v623 = vadd.f32 %v621, 0.0
        %v624 = vld [vmem:[#allocation2] sm:$0xff]
        %v625 = vld [vmem:[#allocation2 + $0x8] sm:$0xff]
        %s627 = vtos %v611
        %v628 = vstv %s627
        %v630 = vmul.f32 %v624, %v628
        %v631 = vmul.f32 %v625, %v628
        %v632 = vld [vmem:[#allocation3] sm:$0xff]
        %v633 = vld [vmem:[#allocation3 + $0x8] sm:$0xff]
        %s635 = vtos %v612
        %v636 = vstv %s635
        %v638 = vmul.f32 %v632, %v636
        %v639 = vmul.f32 %v633, %v636
        %v640 = vadd.f32 %v630, %v638
        %v641 = vadd.f32 %v631, %v639
        %v642 = vadd.f32 %v623, %v640
        %v643 = vadd.f32 %v623, %v641
        %644 = vrot.lane.b32.xlu0 %v611, 127
        %v645 = vpop.permute.xlu0 %644
        %s646 = vtos %v645
        %v647 = vstv %s646
        %v649 = vmul.f32 %v624, %v647
        %v650 = vmul.f32 %v625, %v647
        %651 = vrot.lane.b32.xlu0 %v612, 127
        %v652 = vpop.permute.xlu0 %651
        %s653 = vtos %v652
        %v654 = vstv %s653
        %v656 = vmul.f32 %v632, %v654
        %v657 = vmul.f32 %v633, %v654
        %v658 = vadd.f32 %v649, %v656
        %v659 = vadd.f32 %v650, %v657
        %662 = vrot.lane.b32.xlu0 %v658, 127
        %v663 = vpop.permute.xlu0 %662
        %664 = vrot.lane.b32.xlu0 %v659, 127
        %v665 = vpop.permute.xlu0 %664
        %v668 = vadd.f32 %v642, %v663
        %v669 = vadd.f32 %v643, %v665
        %670 = vrot.lane.b32.xlu0 %v611, 126
        %v671 = vpop.permute.xlu0 %670
        %s672 = vtos %v671
        %v673 = vstv %s672
        %v675 = vmul.f32 %v624, %v673
        %v676 = vmul.f32 %v625, %v673
        %677 = vrot.lane.b32.xlu0 %v612, 126
        %v678 = vpop.permute.xlu0 %677
        %s679 = vtos %v678
        %v680 = vstv %s679
        %v682 = vmul.f32 %v632, %v680
        %v683 = vmul.f32 %v633, %v680
        %v684 = vadd.f32 %v675, %v682
        %v685 = vadd.f32 %v676, %v683
        %688 = vrot.lane.b32.xlu0 %v684, 126
        %v689 = vpop.permute.xlu0 %688
        %690 = vrot.lane.b32.xlu0 %v685, 126
        %v691 = vpop.permute.xlu0 %690
        %v694 = vadd.f32 %v668, %v689
        %v695 = vadd.f32 %v669, %v691
        %696 = vrot.lane.b32.xlu0 %v611, 125
        %v697 = vpop.permute.xlu0 %696
        %s698 = vtos %v697
        %v699 = vstv %s698
        %v701 = vmul.f32 %v624, %v699
        %v702 = vmul.f32 %v625, %v699
        %703 = vrot.lane.b32.xlu0 %v612, 125
        %v704 = vpop.permute.xlu0 %703
        %s705 = vtos %v704
        %v706 = vstv %s705
        %v708 = vmul.f32 %v632, %v706
        %v709 = vmul.f32 %v633, %v706
        %v710 = vadd.f32 %v701, %v708
        %v711 = vadd.f32 %v702, %v709
        %714 = vrot.lane.b32.xlu0 %v710, 125
        %v715 = vpop.permute.xlu0 %714
        %716 = vrot.lane.b32.xlu0 %v711, 125
        %v717 = vpop.permute.xlu0 %716
        %v720 = vadd.f32 %v694, %v715
        %v721 = vadd.f32 %v695, %v717
        %722 = vrot.lane.b32.xlu0 %v611, 124
        %v723 = vpop.permute.xlu0 %722
        %s724 = vtos %v723
        %v725 = vstv %s724
        %v727 = vmul.f32 %v624, %v725
        %v728 = vmul.f32 %v625, %v725
        %729 = vrot.lane.b32.xlu0 %v612, 124
        %v730 = vpop.permute.xlu0 %729
        %s731 = vtos %v730
        %v732 = vstv %s731
        %v734 = vmul.f32 %v632, %v732
        %v735 = vmul.f32 %v633, %v732
        %v736 = vadd.f32 %v727, %v734
        %v737 = vadd.f32 %v728, %v735
        %740 = vrot.lane.b32.xlu0 %v736, 124
        %v741 = vpop.permute.xlu0 %740
        %742 = vrot.lane.b32.xlu0 %v737, 124
        %v743 = vpop.permute.xlu0 %742
        %v746 = vadd.f32 %v720, %v741
        %v747 = vadd.f32 %v721, %v743
        %748 = vrot.lane.b32.xlu0 %v611, 123
        %v749 = vpop.permute.xlu0 %748
        %s750 = vtos %v749
        %v751 = vstv %s750
        %v753 = vmul.f32 %v624, %v751
        %v754 = vmul.f32 %v625, %v751
        %755 = vrot.lane.b32.xlu0 %v612, 123
        %v756 = vpop.permute.xlu0 %755
        %s757 = vtos %v756
        %v758 = vstv %s757
        %v760 = vmul.f32 %v632, %v758
        %v761 = vmul.f32 %v633, %v758
        %v762 = vadd.f32 %v753, %v760
        %v763 = vadd.f32 %v754, %v761
        %766 = vrot.lane.b32.xlu0 %v762, 123
        %v767 = vpop.permute.xlu0 %766
        %768 = vrot.lane.b32.xlu0 %v763, 123
        %v769 = vpop.permute.xlu0 %768
        %v772 = vadd.f32 %v746, %v767
        %v773 = vadd.f32 %v747, %v769
        %774 = vrot.lane.b32.xlu0 %v611, 122
        %v775 = vpop.permute.xlu0 %774
        %s776 = vtos %v775
        %v777 = vstv %s776
        %v779 = vmul.f32 %v624, %v777
        %v780 = vmul.f32 %v625, %v777
        %781 = vrot.lane.b32.xlu0 %v612, 122
        %v782 = vpop.permute.xlu0 %781
        %s783 = vtos %v782
        %v784 = vstv %s783
        %v786 = vmul.f32 %v632, %v784
        %v787 = vmul.f32 %v633, %v784
        %v788 = vadd.f32 %v779, %v786
        %v789 = vadd.f32 %v780, %v787
        %792 = vrot.lane.b32.xlu0 %v788, 122
        %v793 = vpop.permute.xlu0 %792
        %794 = vrot.lane.b32.xlu0 %v789, 122
        %v795 = vpop.permute.xlu0 %794
        %v798 = vadd.f32 %v772, %v793
        %v799 = vadd.f32 %v773, %v795
        %v800 = vld [vmem:[#allocation2 + $0x1] sm:$0xff]
        %v801 = vld [vmem:[#allocation2 + $0x9] sm:$0xff]
        %v802 = vrot.slane %v611, 1
        %s803 = vtos %v802
        %v804 = vstv %s803
        %v806 = vmul.f32 %v800, %v804
        %v807 = vmul.f32 %v801, %v804
        %v808 = vld [vmem:[#allocation3 + $0x1] sm:$0xff]
        %v809 = vld [vmem:[#allocation3 + $0x9] sm:$0xff]
        %v810 = vrot.slane %v612, 1
        %s811 = vtos %v810
        %v812 = vstv %s811
        %v814 = vmul.f32 %v808, %v812
        %v815 = vmul.f32 %v809, %v812
        %v816 = vadd.f32 %v806, %v814
        %v817 = vadd.f32 %v807, %v815
        %v818 = vadd.f32 %v798, %v816
        %v819 = vadd.f32 %v799, %v817
        %820 = vrot.lane.b32.xlu0 %v802, 127
        %v821 = vpop.permute.xlu0 %820
        %s822 = vtos %v821
        %v823 = vstv %s822
        %v825 = vmul.f32 %v800, %v823
        %v826 = vmul.f32 %v801, %v823
        %827 = vrot.lane.b32.xlu0 %v810, 127
        %v828 = vpop.permute.xlu0 %827
        %s829 = vtos %v828
        %v830 = vstv %s829
        %v832 = vmul.f32 %v808, %v830
        %v833 = vmul.f32 %v809, %v830
        %v834 = vadd.f32 %v825, %v832
        %v835 = vadd.f32 %v826, %v833
        %838 = vrot.lane.b32.xlu0 %v834, 127
        %v839 = vpop.permute.xlu0 %838
        %840 = vrot.lane.b32.xlu0 %v835, 127
        %v841 = vpop.permute.xlu0 %840
        %v844 = vadd.f32 %v818, %v839
        %v845 = vadd.f32 %v819, %v841
        %846 = vrot.lane.b32.xlu0 %v802, 126
        %v847 = vpop.permute.xlu0 %846
        %s848 = vtos %v847
        %v849 = vstv %s848
        %v851 = vmul.f32 %v800, %v849
        %v852 = vmul.f32 %v801, %v849
        %853 = vrot.lane.b32.xlu0 %v810, 126
        %v854 = vpop.permute.xlu0 %853
        %s855 = vtos %v854
        %v856 = vstv %s855
        %v858 = vmul.f32 %v808, %v856
        %v859 = vmul.f32 %v809, %v856
        %v860 = vadd.f32 %v851, %v858
        %v861 = vadd.f32 %v852, %v859
        %864 = vrot.lane.b32.xlu0 %v860, 126
        %v865 = vpop.permute.xlu0 %864
        %866 = vrot.lane.b32.xlu0 %v861, 126
        %v867 = vpop.permute.xlu0 %866
        %v870 = vadd.f32 %v844, %v865
        %v871 = vadd.f32 %v845, %v867
        %872 = vrot.lane.b32.xlu0 %v802, 125
        %v873 = vpop.permute.xlu0 %872
        %s874 = vtos %v873
        %v875 = vstv %s874
        %v877 = vmul.f32 %v800, %v875
        %v878 = vmul.f32 %v801, %v875
        %879 = vrot.lane.b32.xlu0 %v810, 125
        %v880 = vpop.permute.xlu0 %879
        %s881 = vtos %v880
        %v882 = vstv %s881
        %v884 = vmul.f32 %v808, %v882
        %v885 = vmul.f32 %v809, %v882
        %v886 = vadd.f32 %v877, %v884
        %v887 = vadd.f32 %v878, %v885
        %890 = vrot.lane.b32.xlu0 %v886, 125
        %v891 = vpop.permute.xlu0 %890
        %892 = vrot.lane.b32.xlu0 %v887, 125
        %v893 = vpop.permute.xlu0 %892
        %v896 = vadd.f32 %v870, %v891
        %v897 = vadd.f32 %v871, %v893
        %898 = vrot.lane.b32.xlu0 %v802, 124
        %v899 = vpop.permute.xlu0 %898
        %s900 = vtos %v899
        %v901 = vstv %s900
        %v903 = vmul.f32 %v800, %v901
        %v904 = vmul.f32 %v801, %v901
        %905 = vrot.lane.b32.xlu0 %v810, 124
        %v906 = vpop.permute.xlu0 %905
        %s907 = vtos %v906
        %v908 = vstv %s907
        %v910 = vmul.f32 %v808, %v908
        %v911 = vmul.f32 %v809, %v908
        %v912 = vadd.f32 %v903, %v910
        %v913 = vadd.f32 %v904, %v911
        %916 = vrot.lane.b32.xlu0 %v912, 124
        %v917 = vpop.permute.xlu0 %916
        %918 = vrot.lane.b32.xlu0 %v913, 124
        %v919 = vpop.permute.xlu0 %918
        %v922 = vadd.f32 %v896, %v917
        %v923 = vadd.f32 %v897, %v919
        %924 = vrot.lane.b32.xlu0 %v802, 123
        %v925 = vpop.permute.xlu0 %924
        %s926 = vtos %v925
        %v927 = vstv %s926
        %v929 = vmul.f32 %v800, %v927
        %v930 = vmul.f32 %v801, %v927
        %931 = vrot.lane.b32.xlu0 %v810, 123
        %v932 = vpop.permute.xlu0 %931
        %s933 = vtos %v932
        %v934 = vstv %s933
        %v936 = vmul.f32 %v808, %v934
        %v937 = vmul.f32 %v809, %v934
        %v938 = vadd.f32 %v929, %v936
        %v939 = vadd.f32 %v930, %v937
        %942 = vrot.lane.b32.xlu0 %v938, 123
        %v943 = vpop.permute.xlu0 %942
        %944 = vrot.lane.b32.xlu0 %v939, 123
        %v945 = vpop.permute.xlu0 %944
        %v948 = vadd.f32 %v922, %v943
        %v949 = vadd.f32 %v923, %v945
        %950 = vrot.lane.b32.xlu0 %v802, 122
        %v951 = vpop.permute.xlu0 %950
        %s952 = vtos %v951
        %v953 = vstv %s952
        %v955 = vmul.f32 %v800, %v953
        %v956 = vmul.f32 %v801, %v953
        %957 = vrot.lane.b32.xlu0 %v810, 122
        %v958 = vpop.permute.xlu0 %957
        %s959 = vtos %v958
        %v960 = vstv %s959
        %v962 = vmul.f32 %v808, %v960
        %v963 = vmul.f32 %v809, %v960
        %v964 = vadd.f32 %v955, %v962
        %v965 = vadd.f32 %v956, %v963
        %968 = vrot.lane.b32.xlu0 %v964, 122
        %v969 = vpop.permute.xlu0 %968
        %970 = vrot.lane.b32.xlu0 %v965, 122
        %v971 = vpop.permute.xlu0 %970
        %v974 = vadd.f32 %v948, %v969
        %v975 = vadd.f32 %v949, %v971
        %v976 = vld [vmem:[#allocation2 + $0x2] sm:$0xff]
        %v977 = vld [vmem:[#allocation2 + $0xa] sm:$0xff]
        %v978 = vrot.slane %v611, 2
        %s979 = vtos %v978
        %v980 = vstv %s979
        %v982 = vmul.f32 %v976, %v980
        %v983 = vmul.f32 %v977, %v980
        %v984 = vld [vmem:[#allocation3 + $0x2] sm:$0xff]
        %v985 = vld [vmem:[#allocation3 + $0xa] sm:$0xff]
        %v986 = vrot.slane %v612, 2
        %s987 = vtos %v986
        %v988 = vstv %s987
        %v990 = vmul.f32 %v984, %v988
        %v991 = vmul.f32 %v985, %v988
        %v992 = vadd.f32 %v982, %v990
        %v993 = vadd.f32 %v983, %v991
        %v994 = vadd.f32 %v974, %v992
        %v995 = vadd.f32 %v975, %v993
        %996 = vrot.lane.b32.xlu0 %v978, 127
        %v997 = vpop.permute.xlu0 %996
        %s998 = vtos %v997
        %v999 = vstv %s998
        %v1001 = vmul.f32 %v976, %v999
        %v1002 = vmul.f32 %v977, %v999
        %1003 = vrot.lane.b32.xlu0 %v986, 127
        %v1004 = vpop.permute.xlu0 %1003
        %s1005 = vtos %v1004
        %v1006 = vstv %s1005
        %v1008 = vmul.f32 %v984, %v1006
        %v1009 = vmul.f32 %v985, %v1006
        %v1010 = vadd.f32 %v1001, %v1008
        %v1011 = vadd.f32 %v1002, %v1009
        %1014 = vrot.lane.b32.xlu0 %v1010, 127
        %v1015 = vpop.permute.xlu0 %1014
        %1016 = vrot.lane.b32.xlu0 %v1011, 127
        %v1017 = vpop.permute.xlu0 %1016
        %v1020 = vadd.f32 %v994, %v1015
        %v1021 = vadd.f32 %v995, %v1017
        %1022 = vrot.lane.b32.xlu0 %v978, 126
        %v1023 = vpop.permute.xlu0 %1022
        %s1024 = vtos %v1023
        %v1025 = vstv %s1024
        %v1027 = vmul.f32 %v976, %v1025
        %v1028 = vmul.f32 %v977, %v1025
        %1029 = vrot.lane.b32.xlu0 %v986, 126
        %v1030 = vpop.permute.xlu0 %1029
        %s1031 = vtos %v1030
        %v1032 = vstv %s1031
        %v1034 = vmul.f32 %v984, %v1032
        %v1035 = vmul.f32 %v985, %v1032
        %v1036 = vadd.f32 %v1027, %v1034
        %v1037 = vadd.f32 %v1028, %v1035
        %1040 = vrot.lane.b32.xlu0 %v1036, 126
        %v1041 = vpop.permute.xlu0 %1040
        %1042 = vrot.lane.b32.xlu0 %v1037, 126
        %v1043 = vpop.permute.xlu0 %1042
        %v1046 = vadd.f32 %v1020, %v1041
        %v1047 = vadd.f32 %v1021, %v1043
        %1048 = vrot.lane.b32.xlu0 %v978, 125
        %v1049 = vpop.permute.xlu0 %1048
        %s1050 = vtos %v1049
        %v1051 = vstv %s1050
        %v1053 = vmul.f32 %v976, %v1051
        %v1054 = vmul.f32 %v977, %v1051
        %1055 = vrot.lane.b32.xlu0 %v986, 125
        %v1056 = vpop.permute.xlu0 %1055
        %s1057 = vtos %v1056
        %v1058 = vstv %s1057
        %v1060 = vmul.f32 %v984, %v1058
        %v1061 = vmul.f32 %v985, %v1058
        %v1062 = vadd.f32 %v1053, %v1060
        %v1063 = vadd.f32 %v1054, %v1061
        %1066 = vrot.lane.b32.xlu0 %v1062, 125
        %v1067 = vpop.permute.xlu0 %1066
        %1068 = vrot.lane.b32.xlu0 %v1063, 125
        %v1069 = vpop.permute.xlu0 %1068
        %v1072 = vadd.f32 %v1046, %v1067
        %v1073 = vadd.f32 %v1047, %v1069
        %1074 = vrot.lane.b32.xlu0 %v978, 124
        %v1075 = vpop.permute.xlu0 %1074
        %s1076 = vtos %v1075
        %v1077 = vstv %s1076
        %v1079 = vmul.f32 %v976, %v1077
        %v1080 = vmul.f32 %v977, %v1077
        %1081 = vrot.lane.b32.xlu0 %v986, 124
        %v1082 = vpop.permute.xlu0 %1081
        %s1083 = vtos %v1082
        %v1084 = vstv %s1083
        %v1086 = vmul.f32 %v984, %v1084
        %v1087 = vmul.f32 %v985, %v1084
        %v1088 = vadd.f32 %v1079, %v1086
        %v1089 = vadd.f32 %v1080, %v1087
        %1092 = vrot.lane.b32.xlu0 %v1088, 124
        %v1093 = vpop.permute.xlu0 %1092
        %1094 = vrot.lane.b32.xlu0 %v1089, 124
        %v1095 = vpop.permute.xlu0 %1094
        %v1098 = vadd.f32 %v1072, %v1093
        %v1099 = vadd.f32 %v1073, %v1095
        %1100 = vrot.lane.b32.xlu0 %v978, 123
        %v1101 = vpop.permute.xlu0 %1100
        %s1102 = vtos %v1101
        %v1103 = vstv %s1102
        %v1105 = vmul.f32 %v976, %v1103
        %v1106 = vmul.f32 %v977, %v1103
        %1107 = vrot.lane.b32.xlu0 %v986, 123
        %v1108 = vpop.permute.xlu0 %1107
        %s1109 = vtos %v1108
        %v1110 = vstv %s1109
        %v1112 = vmul.f32 %v984, %v1110
        %v1113 = vmul.f32 %v985, %v1110
        %v1114 = vadd.f32 %v1105, %v1112
        %v1115 = vadd.f32 %v1106, %v1113
        %1118 = vrot.lane.b32.xlu0 %v1114, 123
        %v1119 = vpop.permute.xlu0 %1118
        %1120 = vrot.lane.b32.xlu0 %v1115, 123
        %v1121 = vpop.permute.xlu0 %1120
        %v1124 = vadd.f32 %v1098, %v1119
        %v1125 = vadd.f32 %v1099, %v1121
        %1126 = vrot.lane.b32.xlu0 %v978, 122
        %v1127 = vpop.permute.xlu0 %1126
        %s1128 = vtos %v1127
        %v1129 = vstv %s1128
        %v1131 = vmul.f32 %v976, %v1129
        %v1132 = vmul.f32 %v977, %v1129
        %1133 = vrot.lane.b32.xlu0 %v986, 122
        %v1134 = vpop.permute.xlu0 %1133
        %s1135 = vtos %v1134
        %v1136 = vstv %s1135
        %v1138 = vmul.f32 %v984, %v1136
        %v1139 = vmul.f32 %v985, %v1136
        %v1140 = vadd.f32 %v1131, %v1138
        %v1141 = vadd.f32 %v1132, %v1139
        %1144 = vrot.lane.b32.xlu0 %v1140, 122
        %v1145 = vpop.permute.xlu0 %1144
        %1146 = vrot.lane.b32.xlu0 %v1141, 122
        %v1147 = vpop.permute.xlu0 %1146
        %v1150 = vadd.f32 %v1124, %v1145
        %v1151 = vadd.f32 %v1125, %v1147
        %v1152 = vld [vmem:[#allocation2 + $0x3] sm:$0xff]
        %v1153 = vld [vmem:[#allocation2 + $0xb] sm:$0xff]
        %v1154 = vrot.slane %v611, 3
        %s1155 = vtos %v1154
        %v1156 = vstv %s1155
        %v1158 = vmul.f32 %v1152, %v1156
        %v1159 = vmul.f32 %v1153, %v1156
        %v1160 = vld [vmem:[#allocation3 + $0x3] sm:$0xff]
        %v1161 = vld [vmem:[#allocation3 + $0xb] sm:$0xff]
        %v1162 = vrot.slane %v612, 3
        %s1163 = vtos %v1162
        %v1164 = vstv %s1163
        %v1166 = vmul.f32 %v1160, %v1164
        %v1167 = vmul.f32 %v1161, %v1164
        %v1168 = vadd.f32 %v1158, %v1166
        %v1169 = vadd.f32 %v1159, %v1167
        %v1170 = vadd.f32 %v1150, %v1168
        %v1171 = vadd.f32 %v1151, %v1169
        %1172 = vrot.lane.b32.xlu0 %v1154, 127
        %v1173 = vpop.permute.xlu0 %1172
        %s1174 = vtos %v1173
        %v1175 = vstv %s1174
        %v1177 = vmul.f32 %v1152, %v1175
        %v1178 = vmul.f32 %v1153, %v1175
        %1179 = vrot.lane.b32.xlu0 %v1162, 127
        %v1180 = vpop.permute.xlu0 %1179
        %s1181 = vtos %v1180
        %v1182 = vstv %s1181
        %v1184 = vmul.f32 %v1160, %v1182
        %v1185 = vmul.f32 %v1161, %v1182
        %v1186 = vadd.f32 %v1177, %v1184
        %v1187 = vadd.f32 %v1178, %v1185
        %1190 = vrot.lane.b32.xlu0 %v1186, 127
        %v1191 = vpop.permute.xlu0 %1190
        %1192 = vrot.lane.b32.xlu0 %v1187, 127
        %v1193 = vpop.permute.xlu0 %1192
        %v1196 = vadd.f32 %v1170, %v1191
        %v1197 = vadd.f32 %v1171, %v1193
        %1198 = vrot.lane.b32.xlu0 %v1154, 126
        %v1199 = vpop.permute.xlu0 %1198
        %s1200 = vtos %v1199
        %v1201 = vstv %s1200
        %v1203 = vmul.f32 %v1152, %v1201
        %v1204 = vmul.f32 %v1153, %v1201
        %1205 = vrot.lane.b32.xlu0 %v1162, 126
        %v1206 = vpop.permute.xlu0 %1205
        %s1207 = vtos %v1206
        %v1208 = vstv %s1207
        %v1210 = vmul.f32 %v1160, %v1208
        %v1211 = vmul.f32 %v1161, %v1208
        %v1212 = vadd.f32 %v1203, %v1210
        %v1213 = vadd.f32 %v1204, %v1211
        %1216 = vrot.lane.b32.xlu0 %v1212, 126
        %v1217 = vpop.permute.xlu0 %1216
        %1218 = vrot.lane.b32.xlu0 %v1213, 126
        %v1219 = vpop.permute.xlu0 %1218
        %v1222 = vadd.f32 %v1196, %v1217
        %v1223 = vadd.f32 %v1197, %v1219
        %1224 = vrot.lane.b32.xlu0 %v1154, 125
        %v1225 = vpop.permute.xlu0 %1224
        %s1226 = vtos %v1225
        %v1227 = vstv %s1226
        %v1229 = vmul.f32 %v1152, %v1227
        %v1230 = vmul.f32 %v1153, %v1227
        %1231 = vrot.lane.b32.xlu0 %v1162, 125
        %v1232 = vpop.permute.xlu0 %1231
        %s1233 = vtos %v1232
        %v1234 = vstv %s1233
        %v1236 = vmul.f32 %v1160, %v1234
        %v1237 = vmul.f32 %v1161, %v1234
        %v1238 = vadd.f32 %v1229, %v1236
        %v1239 = vadd.f32 %v1230, %v1237
        %1242 = vrot.lane.b32.xlu0 %v1238, 125
        %v1243 = vpop.permute.xlu0 %1242
        %1244 = vrot.lane.b32.xlu0 %v1239, 125
        %v1245 = vpop.permute.xlu0 %1244
        %v1248 = vadd.f32 %v1222, %v1243
        %v1249 = vadd.f32 %v1223, %v1245
        %1250 = vrot.lane.b32.xlu0 %v1154, 124
        %v1251 = vpop.permute.xlu0 %1250
        %s1252 = vtos %v1251
        %v1253 = vstv %s1252
        %v1255 = vmul.f32 %v1152, %v1253
        %v1256 = vmul.f32 %v1153, %v1253
        %1257 = vrot.lane.b32.xlu0 %v1162, 124
        %v1258 = vpop.permute.xlu0 %1257
        %s1259 = vtos %v1258
        %v1260 = vstv %s1259
        %v1262 = vmul.f32 %v1160, %v1260
        %v1263 = vmul.f32 %v1161, %v1260
        %v1264 = vadd.f32 %v1255, %v1262
        %v1265 = vadd.f32 %v1256, %v1263
        %1268 = vrot.lane.b32.xlu0 %v1264, 124
        %v1269 = vpop.permute.xlu0 %1268
        %1270 = vrot.lane.b32.xlu0 %v1265, 124
        %v1271 = vpop.permute.xlu0 %1270
        %v1274 = vadd.f32 %v1248, %v1269
        %v1275 = vadd.f32 %v1249, %v1271
        %1276 = vrot.lane.b32.xlu0 %v1154, 123
        %v1277 = vpop.permute.xlu0 %1276
        %s1278 = vtos %v1277
        %v1279 = vstv %s1278
        %v1281 = vmul.f32 %v1152, %v1279
        %v1282 = vmul.f32 %v1153, %v1279
        %1283 = vrot.lane.b32.xlu0 %v1162, 123
        %v1284 = vpop.permute.xlu0 %1283
        %s1285 = vtos %v1284
        %v1286 = vstv %s1285
        %v1288 = vmul.f32 %v1160, %v1286
        %v1289 = vmul.f32 %v1161, %v1286
        %v1290 = vadd.f32 %v1281, %v1288
        %v1291 = vadd.f32 %v1282, %v1289
        %1294 = vrot.lane.b32.xlu0 %v1290, 123
        %v1295 = vpop.permute.xlu0 %1294
        %1296 = vrot.lane.b32.xlu0 %v1291, 123
        %v1297 = vpop.permute.xlu0 %1296
        %v1300 = vadd.f32 %v1274, %v1295
        %v1301 = vadd.f32 %v1275, %v1297
        %1302 = vrot.lane.b32.xlu0 %v1154, 122
        %v1303 = vpop.permute.xlu0 %1302
        %s1304 = vtos %v1303
        %v1305 = vstv %s1304
        %v1307 = vmul.f32 %v1152, %v1305
        %v1308 = vmul.f32 %v1153, %v1305
        %1309 = vrot.lane.b32.xlu0 %v1162, 122
        %v1310 = vpop.permute.xlu0 %1309
        %s1311 = vtos %v1310
        %v1312 = vstv %s1311
        %v1314 = vmul.f32 %v1160, %v1312
        %v1315 = vmul.f32 %v1161, %v1312
        %v1316 = vadd.f32 %v1307, %v1314
        %v1317 = vadd.f32 %v1308, %v1315
        %1320 = vrot.lane.b32.xlu0 %v1316, 122
        %v1321 = vpop.permute.xlu0 %1320
        %1322 = vrot.lane.b32.xlu0 %v1317, 122
        %v1323 = vpop.permute.xlu0 %1322
        %v1326 = vadd.f32 %v1300, %v1321
        %v1327 = vadd.f32 %v1301, %v1323
        %v1328 = vld [vmem:[#allocation2 + $0x4] sm:$0xff]
        %v1329 = vld [vmem:[#allocation2 + $0xc] sm:$0xff]
        %v1330 = vrot.slane %v611, 4
        %s1331 = vtos %v1330
        %v1332 = vstv %s1331
        %v1334 = vmul.f32 %v1328, %v1332
        %v1335 = vmul.f32 %v1329, %v1332
        %v1336 = vld [vmem:[#allocation3 + $0x4] sm:$0xff]
        %v1337 = vld [vmem:[#allocation3 + $0xc] sm:$0xff]
        %v1338 = vrot.slane %v612, 4
        %s1339 = vtos %v1338
        %v1340 = vstv %s1339
        %v1342 = vmul.f32 %v1336, %v1340
        %v1343 = vmul.f32 %v1337, %v1340
        %v1344 = vadd.f32 %v1334, %v1342
        %v1345 = vadd.f32 %v1335, %v1343
        %v1346 = vadd.f32 %v1326, %v1344
        %v1347 = vadd.f32 %v1327, %v1345
        %1348 = vrot.lane.b32.xlu0 %v1330, 127
        %v1349 = vpop.permute.xlu0 %1348
        %s1350 = vtos %v1349
        %v1351 = vstv %s1350
        %v1353 = vmul.f32 %v1328, %v1351
        %v1354 = vmul.f32 %v1329, %v1351
        %1355 = vrot.lane.b32.xlu0 %v1338, 127
        %v1356 = vpop.permute.xlu0 %1355
        %s1357 = vtos %v1356
        %v1358 = vstv %s1357
        %v1360 = vmul.f32 %v1336, %v1358
        %v1361 = vmul.f32 %v1337, %v1358
        %v1362 = vadd.f32 %v1353, %v1360
        %v1363 = vadd.f32 %v1354, %v1361
        %1366 = vrot.lane.b32.xlu0 %v1362, 127
        %v1367 = vpop.permute.xlu0 %1366
        %1368 = vrot.lane.b32.xlu0 %v1363, 127
        %v1369 = vpop.permute.xlu0 %1368
        %v1372 = vadd.f32 %v1346, %v1367
        %v1373 = vadd.f32 %v1347, %v1369
        %1374 = vrot.lane.b32.xlu0 %v1330, 126
        %v1375 = vpop.permute.xlu0 %1374
        %s1376 = vtos %v1375
        %v1377 = vstv %s1376
        %v1379 = vmul.f32 %v1328, %v1377
        %v1380 = vmul.f32 %v1329, %v1377
        %1381 = vrot.lane.b32.xlu0 %v1338, 126
        %v1382 = vpop.permute.xlu0 %1381
        %s1383 = vtos %v1382
        %v1384 = vstv %s1383
        %v1386 = vmul.f32 %v1336, %v1384
        %v1387 = vmul.f32 %v1337, %v1384
        %v1388 = vadd.f32 %v1379, %v1386
        %v1389 = vadd.f32 %v1380, %v1387
        %1392 = vrot.lane.b32.xlu0 %v1388, 126
        %v1393 = vpop.permute.xlu0 %1392
        %1394 = vrot.lane.b32.xlu0 %v1389, 126
        %v1395 = vpop.permute.xlu0 %1394
        %v1398 = vadd.f32 %v1372, %v1393
        %v1399 = vadd.f32 %v1373, %v1395
        %1400 = vrot.lane.b32.xlu0 %v1330, 125
        %v1401 = vpop.permute.xlu0 %1400
        %s1402 = vtos %v1401
        %v1403 = vstv %s1402
        %v1405 = vmul.f32 %v1328, %v1403
        %v1406 = vmul.f32 %v1329, %v1403
        %1407 = vrot.lane.b32.xlu0 %v1338, 125
        %v1408 = vpop.permute.xlu0 %1407
        %s1409 = vtos %v1408
        %v1410 = vstv %s1409
        %v1412 = vmul.f32 %v1336, %v1410
        %v1413 = vmul.f32 %v1337, %v1410
        %v1414 = vadd.f32 %v1405, %v1412
        %v1415 = vadd.f32 %v1406, %v1413
        %1418 = vrot.lane.b32.xlu0 %v1414, 125
        %v1419 = vpop.permute.xlu0 %1418
        %1420 = vrot.lane.b32.xlu0 %v1415, 125
        %v1421 = vpop.permute.xlu0 %1420
        %v1424 = vadd.f32 %v1398, %v1419
        %v1425 = vadd.f32 %v1399, %v1421
        %1426 = vrot.lane.b32.xlu0 %v1330, 124
        %v1427 = vpop.permute.xlu0 %1426
        %s1428 = vtos %v1427
        %v1429 = vstv %s1428
        %v1431 = vmul.f32 %v1328, %v1429
        %v1432 = vmul.f32 %v1329, %v1429
        %1433 = vrot.lane.b32.xlu0 %v1338, 124
        %v1434 = vpop.permute.xlu0 %1433
        %s1435 = vtos %v1434
        %v1436 = vstv %s1435
        %v1438 = vmul.f32 %v1336, %v1436
        %v1439 = vmul.f32 %v1337, %v1436
        %v1440 = vadd.f32 %v1431, %v1438
        %v1441 = vadd.f32 %v1432, %v1439
        %1444 = vrot.lane.b32.xlu0 %v1440, 124
        %v1445 = vpop.permute.xlu0 %1444
        %1446 = vrot.lane.b32.xlu0 %v1441, 124
        %v1447 = vpop.permute.xlu0 %1446
        %v1450 = vadd.f32 %v1424, %v1445
        %v1451 = vadd.f32 %v1425, %v1447
        %1452 = vrot.lane.b32.xlu0 %v1330, 123
        %v1453 = vpop.permute.xlu0 %1452
        %s1454 = vtos %v1453
        %v1455 = vstv %s1454
        %v1457 = vmul.f32 %v1328, %v1455
        %v1458 = vmul.f32 %v1329, %v1455
        %1459 = vrot.lane.b32.xlu0 %v1338, 123
        %v1460 = vpop.permute.xlu0 %1459
        %s1461 = vtos %v1460
        %v1462 = vstv %s1461
        %v1464 = vmul.f32 %v1336, %v1462
        %v1465 = vmul.f32 %v1337, %v1462
        %v1466 = vadd.f32 %v1457, %v1464
        %v1467 = vadd.f32 %v1458, %v1465
        %1470 = vrot.lane.b32.xlu0 %v1466, 123
        %v1471 = vpop.permute.xlu0 %1470
        %1472 = vrot.lane.b32.xlu0 %v1467, 123
        %v1473 = vpop.permute.xlu0 %1472
        %v1476 = vadd.f32 %v1450, %v1471
        %v1477 = vadd.f32 %v1451, %v1473
        %1478 = vrot.lane.b32.xlu0 %v1330, 122
        %v1479 = vpop.permute.xlu0 %1478
        %s1480 = vtos %v1479
        %v1481 = vstv %s1480
        %v1483 = vmul.f32 %v1328, %v1481
        %v1484 = vmul.f32 %v1329, %v1481
        %1485 = vrot.lane.b32.xlu0 %v1338, 122
        %v1486 = vpop.permute.xlu0 %1485
        %s1487 = vtos %v1486
        %v1488 = vstv %s1487
        %v1490 = vmul.f32 %v1336, %v1488
        %v1491 = vmul.f32 %v1337, %v1488
        %v1492 = vadd.f32 %v1483, %v1490
        %v1493 = vadd.f32 %v1484, %v1491
        %1496 = vrot.lane.b32.xlu0 %v1492, 122
        %v1497 = vpop.permute.xlu0 %1496
        %1498 = vrot.lane.b32.xlu0 %v1493, 122
        %v1499 = vpop.permute.xlu0 %1498
        %v1502 = vadd.f32 %v1476, %v1497
        %v1503 = vadd.f32 %v1477, %v1499
        %v1504 = vld [vmem:[#allocation2 + $0x5] sm:$0xff]
        %v1505 = vld [vmem:[#allocation2 + $0xd] sm:$0xff]
        %v1506 = vrot.slane %v611, 5
        %s1507 = vtos %v1506
        %v1508 = vstv %s1507
        %v1510 = vmul.f32 %v1504, %v1508
        %v1511 = vmul.f32 %v1505, %v1508
        %v1512 = vld [vmem:[#allocation3 + $0x5] sm:$0xff]
        %v1513 = vld [vmem:[#allocation3 + $0xd] sm:$0xff]
        %v1514 = vrot.slane %v612, 5
        %s1515 = vtos %v1514
        %v1516 = vstv %s1515
        %v1518 = vmul.f32 %v1512, %v1516
        %v1519 = vmul.f32 %v1513, %v1516
        %v1520 = vadd.f32 %v1510, %v1518
        %v1521 = vadd.f32 %v1511, %v1519
        %v1522 = vadd.f32 %v1502, %v1520
        %v1523 = vadd.f32 %v1503, %v1521
        %1524 = vrot.lane.b32.xlu0 %v1506, 127
        %v1525 = vpop.permute.xlu0 %1524
        %s1526 = vtos %v1525
        %v1527 = vstv %s1526
        %v1529 = vmul.f32 %v1504, %v1527
        %v1530 = vmul.f32 %v1505, %v1527
        %1531 = vrot.lane.b32.xlu0 %v1514, 127
        %v1532 = vpop.permute.xlu0 %1531
        %s1533 = vtos %v1532
        %v1534 = vstv %s1533
        %v1536 = vmul.f32 %v1512, %v1534
        %v1537 = vmul.f32 %v1513, %v1534
        %v1538 = vadd.f32 %v1529, %v1536
        %v1539 = vadd.f32 %v1530, %v1537
        %1542 = vrot.lane.b32.xlu0 %v1538, 127
        %v1543 = vpop.permute.xlu0 %1542
        %1544 = vrot.lane.b32.xlu0 %v1539, 127
        %v1545 = vpop.permute.xlu0 %1544
        %v1548 = vadd.f32 %v1522, %v1543
        %v1549 = vadd.f32 %v1523, %v1545
        %1550 = vrot.lane.b32.xlu0 %v1506, 126
        %v1551 = vpop.permute.xlu0 %1550
        %s1552 = vtos %v1551
        %v1553 = vstv %s1552
        %v1555 = vmul.f32 %v1504, %v1553
        %v1556 = vmul.f32 %v1505, %v1553
        %1557 = vrot.lane.b32.xlu0 %v1514, 126
        %v1558 = vpop.permute.xlu0 %1557
        %s1559 = vtos %v1558
        %v1560 = vstv %s1559
        %v1562 = vmul.f32 %v1512, %v1560
        %v1563 = vmul.f32 %v1513, %v1560
        %v1564 = vadd.f32 %v1555, %v1562
        %v1565 = vadd.f32 %v1556, %v1563
        %1568 = vrot.lane.b32.xlu0 %v1564, 126
        %v1569 = vpop.permute.xlu0 %1568
        %1570 = vrot.lane.b32.xlu0 %v1565, 126
        %v1571 = vpop.permute.xlu0 %1570
        %v1574 = vadd.f32 %v1548, %v1569
        %v1575 = vadd.f32 %v1549, %v1571
        %1576 = vrot.lane.b32.xlu0 %v1506, 125
        %v1577 = vpop.permute.xlu0 %1576
        %s1578 = vtos %v1577
        %v1579 = vstv %s1578
        %v1581 = vmul.f32 %v1504, %v1579
        %v1582 = vmul.f32 %v1505, %v1579
        %1583 = vrot.lane.b32.xlu0 %v1514, 125
        %v1584 = vpop.permute.xlu0 %1583
        %s1585 = vtos %v1584
        %v1586 = vstv %s1585
        %v1588 = vmul.f32 %v1512, %v1586
        %v1589 = vmul.f32 %v1513, %v1586
        %v1590 = vadd.f32 %v1581, %v1588
        %v1591 = vadd.f32 %v1582, %v1589
        %1594 = vrot.lane.b32.xlu0 %v1590, 125
        %v1595 = vpop.permute.xlu0 %1594
        %1596 = vrot.lane.b32.xlu0 %v1591, 125
        %v1597 = vpop.permute.xlu0 %1596
        %v1600 = vadd.f32 %v1574, %v1595
        %v1601 = vadd.f32 %v1575, %v1597
        %1602 = vrot.lane.b32.xlu0 %v1506, 124
        %v1603 = vpop.permute.xlu0 %1602
        %s1604 = vtos %v1603
        %v1605 = vstv %s1604
        %v1607 = vmul.f32 %v1504, %v1605
        %v1608 = vmul.f32 %v1505, %v1605
        %1609 = vrot.lane.b32.xlu0 %v1514, 124
        %v1610 = vpop.permute.xlu0 %1609
        %s1611 = vtos %v1610
        %v1612 = vstv %s1611
        %v1614 = vmul.f32 %v1512, %v1612
        %v1615 = vmul.f32 %v1513, %v1612
        %v1616 = vadd.f32 %v1607, %v1614
        %v1617 = vadd.f32 %v1608, %v1615
        %1620 = vrot.lane.b32.xlu0 %v1616, 124
        %v1621 = vpop.permute.xlu0 %1620
        %1622 = vrot.lane.b32.xlu0 %v1617, 124
        %v1623 = vpop.permute.xlu0 %1622
        %v1626 = vadd.f32 %v1600, %v1621
        %v1627 = vadd.f32 %v1601, %v1623
        %1628 = vrot.lane.b32.xlu0 %v1506, 123
        %v1629 = vpop.permute.xlu0 %1628
        %s1630 = vtos %v1629
        %v1631 = vstv %s1630
        %v1633 = vmul.f32 %v1504, %v1631
        %v1634 = vmul.f32 %v1505, %v1631
        %1635 = vrot.lane.b32.xlu0 %v1514, 123
        %v1636 = vpop.permute.xlu0 %1635
        %s1637 = vtos %v1636
        %v1638 = vstv %s1637
        %v1640 = vmul.f32 %v1512, %v1638
        %v1641 = vmul.f32 %v1513, %v1638
        %v1642 = vadd.f32 %v1633, %v1640
        %v1643 = vadd.f32 %v1634, %v1641
        %1646 = vrot.lane.b32.xlu0 %v1642, 123
        %v1647 = vpop.permute.xlu0 %1646
        %1648 = vrot.lane.b32.xlu0 %v1643, 123
        %v1649 = vpop.permute.xlu0 %1648
        %v1652 = vadd.f32 %v1626, %v1647
        %v1653 = vadd.f32 %v1627, %v1649
        %1654 = vrot.lane.b32.xlu0 %v1506, 122
        %v1655 = vpop.permute.xlu0 %1654
        %s1656 = vtos %v1655
        %v1657 = vstv %s1656
        %v1659 = vmul.f32 %v1504, %v1657
        %v1660 = vmul.f32 %v1505, %v1657
        %1661 = vrot.lane.b32.xlu0 %v1514, 122
        %v1662 = vpop.permute.xlu0 %1661
        %s1663 = vtos %v1662
        %v1664 = vstv %s1663
        %v1666 = vmul.f32 %v1512, %v1664
        %v1667 = vmul.f32 %v1513, %v1664
        %v1668 = vadd.f32 %v1659, %v1666
        %v1669 = vadd.f32 %v1660, %v1667
        %1672 = vrot.lane.b32.xlu0 %v1668, 122
        %v1673 = vpop.permute.xlu0 %1672
        %1674 = vrot.lane.b32.xlu0 %v1669, 122
        %v1675 = vpop.permute.xlu0 %1674
        %v1678 = vadd.f32 %v1652, %v1673
        %v1679 = vadd.f32 %v1653, %v1675
        %v1680 = vld [vmem:[#allocation2 + $0x6] sm:$0xff]
        %v1681 = vld [vmem:[#allocation2 + $0xe] sm:$0xff]
        %v1682 = vrot.slane %v611, 6
        %s1683 = vtos %v1682
        %v1684 = vstv %s1683
        %v1686 = vmul.f32 %v1680, %v1684
        %v1687 = vmul.f32 %v1681, %v1684
        %v1688 = vld [vmem:[#allocation3 + $0x6] sm:$0xff]
        %v1689 = vld [vmem:[#allocation3 + $0xe] sm:$0xff]
        %v1690 = vrot.slane %v612, 6
        %s1691 = vtos %v1690
        %v1692 = vstv %s1691
        %v1694 = vmul.f32 %v1688, %v1692
        %v1695 = vmul.f32 %v1689, %v1692
        %v1696 = vadd.f32 %v1686, %v1694
        %v1697 = vadd.f32 %v1687, %v1695
        %v1698 = vadd.f32 %v1678, %v1696
        %v1699 = vadd.f32 %v1679, %v1697
        %1700 = vrot.lane.b32.xlu0 %v1682, 127
        %v1701 = vpop.permute.xlu0 %1700
        %s1702 = vtos %v1701
        %v1703 = vstv %s1702
        %v1705 = vmul.f32 %v1680, %v1703
        %v1706 = vmul.f32 %v1681, %v1703
        %1707 = vrot.lane.b32.xlu0 %v1690, 127
        %v1708 = vpop.permute.xlu0 %1707
        %s1709 = vtos %v1708
        %v1710 = vstv %s1709
        %v1712 = vmul.f32 %v1688, %v1710
        %v1713 = vmul.f32 %v1689, %v1710
        %v1714 = vadd.f32 %v1705, %v1712
        %v1715 = vadd.f32 %v1706, %v1713
        %1718 = vrot.lane.b32.xlu0 %v1714, 127
        %v1719 = vpop.permute.xlu0 %1718
        %1720 = vrot.lane.b32.xlu0 %v1715, 127
        %v1721 = vpop.permute.xlu0 %1720
        %v1724 = vadd.f32 %v1698, %v1719
        %v1725 = vadd.f32 %v1699, %v1721
        %1726 = vrot.lane.b32.xlu0 %v1682, 126
        %v1727 = vpop.permute.xlu0 %1726
        %s1728 = vtos %v1727
        %v1729 = vstv %s1728
        %v1731 = vmul.f32 %v1680, %v1729
        %v1732 = vmul.f32 %v1681, %v1729
        %1733 = vrot.lane.b32.xlu0 %v1690, 126
        %v1734 = vpop.permute.xlu0 %1733
        %s1735 = vtos %v1734
        %v1736 = vstv %s1735
        %v1738 = vmul.f32 %v1688, %v1736
        %v1739 = vmul.f32 %v1689, %v1736
        %v1740 = vadd.f32 %v1731, %v1738
        %v1741 = vadd.f32 %v1732, %v1739
        %1744 = vrot.lane.b32.xlu0 %v1740, 126
        %v1745 = vpop.permute.xlu0 %1744
        %1746 = vrot.lane.b32.xlu0 %v1741, 126
        %v1747 = vpop.permute.xlu0 %1746
        %v1750 = vadd.f32 %v1724, %v1745
        %v1751 = vadd.f32 %v1725, %v1747
        %1752 = vrot.lane.b32.xlu0 %v1682, 125
        %v1753 = vpop.permute.xlu0 %1752
        %s1754 = vtos %v1753
        %v1755 = vstv %s1754
        %v1757 = vmul.f32 %v1680, %v1755
        %v1758 = vmul.f32 %v1681, %v1755
        %1759 = vrot.lane.b32.xlu0 %v1690, 125
        %v1760 = vpop.permute.xlu0 %1759
        %s1761 = vtos %v1760
        %v1762 = vstv %s1761
        %v1764 = vmul.f32 %v1688, %v1762
        %v1765 = vmul.f32 %v1689, %v1762
        %v1766 = vadd.f32 %v1757, %v1764
        %v1767 = vadd.f32 %v1758, %v1765
        %1770 = vrot.lane.b32.xlu0 %v1766, 125
        %v1771 = vpop.permute.xlu0 %1770
        %1772 = vrot.lane.b32.xlu0 %v1767, 125
        %v1773 = vpop.permute.xlu0 %1772
        %v1776 = vadd.f32 %v1750, %v1771
        %v1777 = vadd.f32 %v1751, %v1773
        %1778 = vrot.lane.b32.xlu0 %v1682, 124
        %v1779 = vpop.permute.xlu0 %1778
        %s1780 = vtos %v1779
        %v1781 = vstv %s1780
        %v1783 = vmul.f32 %v1680, %v1781
        %v1784 = vmul.f32 %v1681, %v1781
        %1785 = vrot.lane.b32.xlu0 %v1690, 124
        %v1786 = vpop.permute.xlu0 %1785
        %s1787 = vtos %v1786
        %v1788 = vstv %s1787
        %v1790 = vmul.f32 %v1688, %v1788
        %v1791 = vmul.f32 %v1689, %v1788
        %v1792 = vadd.f32 %v1783, %v1790
        %v1793 = vadd.f32 %v1784, %v1791
        %1796 = vrot.lane.b32.xlu0 %v1792, 124
        %v1797 = vpop.permute.xlu0 %1796
        %1798 = vrot.lane.b32.xlu0 %v1793, 124
        %v1799 = vpop.permute.xlu0 %1798
        %v1802 = vadd.f32 %v1776, %v1797
        %v1803 = vadd.f32 %v1777, %v1799
        %1804 = vrot.lane.b32.xlu0 %v1682, 123
        %v1805 = vpop.permute.xlu0 %1804
        %s1806 = vtos %v1805
        %v1807 = vstv %s1806
        %v1809 = vmul.f32 %v1680, %v1807
        %v1810 = vmul.f32 %v1681, %v1807
        %1811 = vrot.lane.b32.xlu0 %v1690, 123
        %v1812 = vpop.permute.xlu0 %1811
        %s1813 = vtos %v1812
        %v1814 = vstv %s1813
        %v1816 = vmul.f32 %v1688, %v1814
        %v1817 = vmul.f32 %v1689, %v1814
        %v1818 = vadd.f32 %v1809, %v1816
        %v1819 = vadd.f32 %v1810, %v1817
        %1822 = vrot.lane.b32.xlu0 %v1818, 123
        %v1823 = vpop.permute.xlu0 %1822
        %1824 = vrot.lane.b32.xlu0 %v1819, 123
        %v1825 = vpop.permute.xlu0 %1824
        %v1828 = vadd.f32 %v1802, %v1823
        %v1829 = vadd.f32 %v1803, %v1825
        %1830 = vrot.lane.b32.xlu0 %v1682, 122
        %v1831 = vpop.permute.xlu0 %1830
        %s1832 = vtos %v1831
        %v1833 = vstv %s1832
        %v1835 = vmul.f32 %v1680, %v1833
        %v1836 = vmul.f32 %v1681, %v1833
        %1837 = vrot.lane.b32.xlu0 %v1690, 122
        %v1838 = vpop.permute.xlu0 %1837
        %s1839 = vtos %v1838
        %v1840 = vstv %s1839
        %v1842 = vmul.f32 %v1688, %v1840
        %v1843 = vmul.f32 %v1689, %v1840
        %v1844 = vadd.f32 %v1835, %v1842
        %v1845 = vadd.f32 %v1836, %v1843
        %1848 = vrot.lane.b32.xlu0 %v1844, 122
        %v1849 = vpop.permute.xlu0 %1848
        %1850 = vrot.lane.b32.xlu0 %v1845, 122
        %v1851 = vpop.permute.xlu0 %1850
        %v1854 = vadd.f32 %v1828, %v1849
        %v1855 = vadd.f32 %v1829, %v1851
        %v1856 = vsub.f32 0.0, %v1854
        %v1857 = vsub.f32 0.0, %v1855
        %v1858 = vmul.f32 %v1856, 1.442695
        %v1859 = vpow.pop %v1858
        %v1860 = vmul.f32 %v1857, 1.442695
        %v1861 = vpow.pop %v1860
        %v1862 = vadd.f32 %v1859, 1.0
        %v1863 = vadd.f32 %v1861, 1.0
        %v1864 = vrcp.pop %v1862
        %v1865 = vmul.f32 1.0, %v1864
        %v1866 = vrcp.pop %v1863
        %v1867 = vmul.f32 1.0, %v1866
        %v1868 = vmul.f32 %v543, %v1865
        %v1869 = vmul.f32 %v544, %v1867
        %v1870 = vmul.f32 %v545, %v1865
        %v1871 = vmul.f32 %v546, %v1867
        %v1872 = vmul.f32 %v547, %v1865
        %v1873 = vmul.f32 %v548, %v1867
        %v1874 = vmul.f32 %v549, %v1865
        %v1875 = vmul.f32 %v550, %v1867
        %v1876 = vadd.f32 %v1868, %v270
        %v1877 = vadd.f32 %v1869, %v271
        %v1878 = vadd.f32 %v1870, %v272
        %v1879 = vadd.f32 %v1871, %v273
        %v1880 = vadd.f32 %v1872, %v274
        %v1881 = vadd.f32 %v1873, %v275
        %v1882 = vadd.f32 %v1874, %v276
        %v1883 = vadd.f32 %v1875, %v277
        %1884 = vst.msk [vmem:[%s269] sm:$0xff] %vm278, %v1876
        %1885 = vst.msk [vmem:[%s269 + $0x8] sm:$0xff] %vm278, %v1877
        %1886 = vst.msk [vmem:[%s269 + $0x10] sm:$0xff] %vm278, %v1878
        %1887 = vst.msk [vmem:[%s269 + $0x18] sm:$0xff] %vm278, %v1879
        %1888 = vst.msk [vmem:[%s269 + $0x20] sm:$0xff] %vm278, %v1880
        %1889 = vst.msk [vmem:[%s269 + $0x28] sm:$0xff] %vm278, %v1881
        %1890 = vst.msk [vmem:[%s269 + $0x30] sm:$0xff] %vm278, %v1882
        %1891 = vst.msk [vmem:[%s269 + $0x38] sm:$0xff] %vm278, %v1883
        %s1892 = sand.u32 %s143, 1
        %s1893 = scalar_lea.sflag [#allocation7], %s1892
        %s1894 = sand.u32 %s143, 1
        %s1895 = smul.addr %s1894, 64
        %s1896 = scalar_lea.vmem [#allocation11], %s1895
        // Predicated region
        $region53: #{tpu_custom_call.1} parent=39 // pred_check
          %p1897 = pneg %p153
        $region54: #{tpu_custom_call.1} parent=39 // pred_check_branch
          %1899 = sbr.rel (%p1897) target = $region56
        $region55: #{tpu_custom_call.1} parent=39 // pred_region
          %s1901 = ssub.s32 1024, 1024
          %1902 = vsyncadd %s1893, %s1901
          %s1903 = smul.addr %s25, 8
          %s1904 = smul.addr %s1903, 128
          %s1905 = scalar_lea.hbm %s5, %s1904
          %s1906 = sshll.u32 %s1896, 4
          %s1907 = int_to_ptr.vmem [resolvable:$true] %s1906
          %1912 = dma.vmem_to_hbm [thread:$0]  %s1907, 1024, %s1905, %s1893, 128, 128, 8
        $region56: #{tpu_custom_call.1} parent=39 // pred_fallthru
          _
      $region40: #{tpu_custom_call.1} parent=5 // pred_fallthru
        _
      %p1913 = scmp.le.s32.totalorder 2, %s20
      // Predicated region
      $region57: #{tpu_custom_call.1} parent=5 // pred_check
        %p1914 = pneg %p1913
      $region58: #{tpu_custom_call.1} parent=5 // pred_check_branch
        %1916 = sbr.rel (%p1914) target = $region60
      $region59: #{tpu_custom_call.1} parent=5 // pred_region
        %s1917 = ssub.s32 %s20, 2
        // Predicated region
        $region61: #{tpu_custom_call.1} parent=59 // pred_check
          %p1918 = pneg %p159
        $region62: #{tpu_custom_call.1} parent=59 // pred_check_branch
          %1920 = sbr.rel (%p1918) target = $region64
        $region63: #{tpu_custom_call.1} parent=59 // pred_region
          %s1921 = sand.u32 %s144, 1
          %s1922 = scalar_lea.sflag [#allocation7], %s1921
          %s1923 = sand.u32 %s144, 1
          %s1924 = smul.addr %s1923, 64
          %s1925 = scalar_lea.vmem [#allocation11], %s1924
          %1926 = dma.done %s1922, 1024
        $region64: #{tpu_custom_call.1} parent=59 // pred_fallthru
          _
      $region60: #{tpu_custom_call.1} parent=5 // pred_fallthru
        _
    $region6: #{tpu_custom_call.1} parent=1 // loop_footer
      %s24 = sadd.s32 1, %s20
    $region7: #{tpu_custom_call.1} parent=1 // loop_footer_branch
      %19 = sbr.rel target = $region3
    $region8: #{tpu_custom_call.1} parent=1 // loop_exit
      _
    %1927 = vsyncpa [#allocation6], 1
    %s1928 = scalar_lea.sflag [#allocation6], 1
    %1929 = vsyncpa %s1928, 1
    %1930 = vsyncpa [#allocation9], 1
    %1931 = vsyncpa [#allocation7], 1
    %s1932 = scalar_lea.sflag [#allocation7], 1
    %1933 = vsyncpa %s1932, 1

</llo_original>
